<compile_context>
chip_gen: v7x
topology: tpu7x:2x2x1
jax: 0.10.0
libtpu: 0.0.40
codegen_flags: <defaults>
</compile_context>

<pallas_src>
import jax
import jax.numpy as jnp
from jax.experimental import pallas as pl
from jax.experimental.pallas import tpu as pltpu


_PAD_NEG = -1e30          # logits row-padding value: exp() underflows to exactly 0
_RESCALE_CLAMP = 80.0     # max exponent in the column-state rescale (avoids inf*0)


def clip_loss_kernel(logits_ref, targets_ref,
                     m_col_ref, l_col_ref, tcol_ref, acc_ref):
    """Process one (TM, N) row block; accumulate per-core partial state."""
    j = pl.program_id(1)          # row-block index within this core's share

    @pl.when(j == 0)
    def _init():
        m_col_ref[...] = jnp.full(m_col_ref.shape, -jnp.inf, m_col_ref.dtype)
        l_col_ref[...] = jnp.zeros(l_col_ref.shape, l_col_ref.dtype)
        tcol_ref[...] = jnp.zeros(tcol_ref.shape, tcol_ref.dtype)
        acc_ref[...] = jnp.zeros(acc_ref.shape, acc_ref.dtype)

    x = logits_ref[...].astype(jnp.float32)    # (TM, N)
    t = targets_ref[...].astype(jnp.float32)   # (TM, N)
    tm = x.shape[0]
    n = x.shape[1]

    ones_col = jnp.ones((n, 1), jnp.float32)   # reduction helpers (MXU)
    ones_row = jnp.ones((1, tm), jnp.float32)

    # ---- row direction: exact per-row logsumexp, ONE full-tile exp ----------
    m_row = jnp.max(x, axis=-1, keepdims=True)                       # (TM, 1)
    e = jnp.exp(x - m_row)                                           # (TM, N)
    sum_e = jnp.dot(e, ones_col, preferred_element_type=jnp.float32)  # (TM, 1) MXU
    lse_row = jnp.log(sum_e) + m_row                                 # (TM, 1)

    # Row/column sums of t and the t*x contraction on the (otherwise idle) MXU.
    rowsum_t = jnp.dot(t, ones_col, preferred_element_type=jnp.float32)   # (TM, 1)
    tx_row = jnp.dot(t * x, ones_col, preferred_element_type=jnp.float32)  # (TM, 1)
    acc_ref[...] += jnp.sum(lse_row * rowsum_t) - 2.0 * jnp.sum(tx_row)

    # ---- column direction: online logsumexp reusing `e` (no second full exp)
    ref_max = jnp.max(m_row)                                         # block scalar
    bm_col = jnp.max(x, axis=0, keepdims=True)                       # (1, N)
    new_m = jnp.maximum(m_col_ref[...], bm_col)                      # (1, N)
    w = jnp.exp(m_row - ref_max)                                     # (TM, 1) tiny exp
    # col_e_j = sum_i exp(x_ij - ref_max); reduction on the MXU.
    col_e = jnp.dot(ones_row, e * w, preferred_element_type=jnp.float32)   # (1, N)
    # Clamp the rescale exponent so (underflowed col_e) * exp(huge) never hits
    # 0 * inf = NaN for extreme logit ranges; the lost mass is the documented
    # single-shift underflow caveat (columns >~88 below the block max).
    rescale = jnp.exp(jnp.minimum(ref_max - new_m, _RESCALE_CLAMP))  # (1, N)
    l_col_ref[...] = (l_col_ref[...] * jnp.exp(m_col_ref[...] - new_m)
                      + col_e * rescale)
    m_col_ref[...] = new_m
    tcol_ref[...] += jnp.dot(ones_row, t, preferred_element_type=jnp.float32)


def _round_up(x, m):
    return ((x + m - 1) // m) * m


def _vmem_budgets():
    """(per-step VMEM working budget, vmem_limit_bytes), generation-aware."""
    try:
        cap = pltpu.get_tpu_info().vmem_capacity_bytes
    except Exception:   # non-TPU backend / older API: stay conservative
        cap = 64 * 1024 * 1024
    if cap >= 100 * 1024 * 1024:                    # v5e / v6e: 128 MiB per core
        return 80 * 1024 * 1024, 100 * 1024 * 1024
    return 40 * 1024 * 1024, 56 * 1024 * 1024       # v7x: 64 MiB per TensorCore


def _pick_block_rows(n_rows, n_cols, itemsize, num_parallel, work_budget_bytes):
    """Pick (tile rows, total row-block count)."""
    # Live VMEM per block row ~= 2 inputs x 2 pipeline buffers (native dtype)
    # + ~5 full-width f32 temporaries (x/t casts, e, t*x, e*w).
    per_row_bytes = n_cols * (4 * itemsize + 20)
    max_rows = max(8, work_budget_bytes // per_row_bytes)
    tm = min(_round_up(n_rows, 8), max_rows, 1024)
    tm = max(8, (tm // 8) * 8)
    nb = _round_up(pl.cdiv(n_rows, tm), num_parallel)
    # Shrink tm onto the chosen block count: keeps the one-time row padding
    # below a single block even for awkward N (no tm-collapse for N = 8*prime).
    tm = max(8, _round_up(pl.cdiv(n_rows, nb), 8))
    return tm, nb


def clip_loss_ref(logits, targets):
    """Pure-JAX reference mirroring the PyTorch module."""
    logits = logits.astype(jnp.float32)
    targets = targets.astype(jnp.float32)
    cad = (-targets * jax.nn.log_softmax(logits, axis=-1)).sum(axis=1)
    img = (-targets.T * jax.nn.log_softmax(logits.T, axis=-1)).sum(axis=1)
    return ((cad + img) / 2.0).mean()


def clip_loss(logits, targets, *, block_rows=None, num_parallel=2):
    """Pallas implementation of CLIPLoss().forward(logits, targets).

    Fast path: pass logits/targets already in bf16 (kernel is HBM-bound and
    accumulates in f32 internally) — do NOT upcast before the call.
    """
    assert logits.shape == targets.shape
    assert logits.ndim == 2 and logits.shape[0] == logits.shape[1], \
        "CLIP loss expects a square [N, N] similarity matrix"
    assert num_parallel >= 1
    N = logits.shape[0]

    # Below one (8,128) tile a Pallas call is pure overhead.
    if N < 128:
        return clip_loss_ref(logits, targets)

    work_budget, vmem_limit = _vmem_budgets()
    itemsize = jnp.dtype(logits.dtype).itemsize
    if block_rows is None:
        tm, nb_total = _pick_block_rows(N, N, itemsize, num_parallel, work_budget)
    else:
        tm = int(block_rows)
        assert tm >= 8 and tm % 8 == 0, tm
        nb_total = _round_up(pl.cdiv(N, tm), num_parallel)
    nb_per_core = nb_total // num_parallel
    n_rows_padded = nb_total * tm

    if n_rows_padded != N:
        pad = n_rows_padded - N
        # Padded logits rows are hugely negative (zero exp contribution);
        # padded target rows are zero (zero loss contribution).
        logits = jnp.pad(logits, ((0, pad), (0, 0)), constant_values=_PAD_NEG)
        targets = jnp.pad(targets, ((0, pad), (0, 0)))

    def in_map(c, j):
        return (c * nb_per_core + j, 0)

    def out_map(c, j):
        return (c, 0, 0)

    out_shape = (
        jax.ShapeDtypeStruct((num_parallel, 1, N), jnp.float32),  # m_col partial
        jax.ShapeDtypeStruct((num_parallel, 1, N), jnp.float32),  # l_col partial
        jax.ShapeDtypeStruct((num_parallel, 1, N), jnp.float32),  # colsum_t partial
        jax.ShapeDtypeStruct((num_parallel, 1, 1), jnp.float32),  # scalar partial
    )

    m_p, l_p, t_p, a_p = pl.pallas_call(
        clip_loss_kernel,
        out_shape=out_shape,
        grid_spec=pltpu.PrefetchScalarGridSpec(
            num_scalar_prefetch=0,
            grid=(num_parallel, nb_per_core),
            in_specs=[
                pl.BlockSpec((tm, N), in_map),   # logits row block
                pl.BlockSpec((tm, N), in_map),   # targets row block
            ],
            out_specs=[
                pl.BlockSpec((None, 1, N), out_map),
                pl.BlockSpec((None, 1, N), out_map),
                pl.BlockSpec((None, 1, N), out_map),
                pl.BlockSpec((None, 1, 1), out_map),
            ],
        ),
        compiler_params=pltpu.CompilerParams(
            dimension_semantics=("parallel", "arbitrary"),
            vmem_limit_bytes=vmem_limit,
        ),
    )(logits, targets)

    # ---- tiny JAX epilogue: combine the per-core partials -------------------
    m = jnp.max(m_p, axis=0)                                      # (1, N)
    m_safe = jnp.where(jnp.isfinite(m), m, jnp.float32(0.0))
    l = jnp.sum(l_p * jnp.exp(m_p - m_safe), axis=0)              # (1, N)
    tiny = jnp.float32(jnp.finfo(jnp.float32).tiny)
    lse_col = jnp.log(jnp.maximum(l, tiny)) + m_safe              # (1, N), log(0) guard
    tcol = jnp.sum(t_p, axis=0)                                   # (1, N)
    total = jnp.sum(a_p) + jnp.sum(lse_col * tcol)
    return total / (2.0 * N)


if __name__ == "__main__":
    key = jax.random.PRNGKey(0)
    k1, k2 = jax.random.split(key)

    N = 256
    logits = jax.random.normal(k1, (N, N), dtype=jnp.float32) * 5.0
    targets = jax.nn.softmax(
        jax.random.normal(k2, (N, N), dtype=jnp.float32), axis=-1)

    # 1) f32, small forced blocks -> grid (2, 2): exercises init / online
    #    column accumulation / cross-core combine.
    loss = clip_loss(logits, targets, block_rows=64)
    jax.block_until_ready(loss)
    ref = clip_loss_ref(logits, targets)
    assert jnp.allclose(loss, ref, atol=1e-3, rtol=1e-3), (loss, ref)

    # 2) bf16 fast path (half the HBM bytes), auto block size.
    logits_bf16 = logits.astype(jnp.bfloat16)
    targets_bf16 = targets.astype(jnp.bfloat16)
    loss_bf16 = clip_loss(logits_bf16, targets_bf16)
    jax.block_until_ready(loss_bf16)
    ref_bf16 = clip_loss_ref(logits_bf16, targets_bf16)
    assert jnp.allclose(loss_bf16, ref_bf16, atol=2e-3, rtol=2e-3), (loss_bf16, ref_bf16)

    # 3) awkward N (not a multiple of the tile): exercises the row-padding path.
    M = 200
    logits_m = jax.random.normal(k1, (M, M), dtype=jnp.float32) * 5.0
    targets_m = jax.nn.softmax(
        jax.random.normal(k2, (M, M), dtype=jnp.float32), axis=-1)
    loss_m = clip_loss(logits_m, targets_m, block_rows=56)
    jax.block_until_ready(loss_m)
    ref_m = clip_loss_ref(logits_m, targets_m)
    assert jnp.allclose(loss_m, ref_m, atol=1e-3, rtol=1e-3), (loss_m, ref_m)

    # 4) moderately wide dynamic range (logits std ~20): must stay accurate.
    loss_w = clip_loss(logits * 4.0, targets, block_rows=64)
    jax.block_until_ready(loss_w)
    ref_w = clip_loss_ref(logits * 4.0, targets)
    assert jnp.allclose(loss_w, ref_w, atol=5e-2, rtol=2e-3), (loss_w, ref_w)

    # 5) extreme range (logits std ~100): column-LSE mass may underflow per the
    #    documented caveat, but the result must stay finite (log(0) guard +
    #    rescale clamp).
    loss_x = clip_loss(logits * 20.0, targets)
    jax.block_until_ready(loss_x)
    assert bool(jnp.isfinite(loss_x)), loss_x

    print("KERNEL_OK")
</pallas_src>

<mosaic_0001>
module attributes {stable_mosaic.version = 11 : i64} {
  func.func @clip_loss_kernel(%arg0: i32, %arg1: i32, %arg2: memref<64x256xf32, #tpu.memory_space<vmem>>, %arg3: memref<64x256xf32, #tpu.memory_space<vmem>>, %arg4: memref<1x1x256xf32, #tpu.memory_space<vmem>>, %arg5: memref<1x1x256xf32, #tpu.memory_space<vmem>>, %arg6: memref<1x1x256xf32, #tpu.memory_space<vmem>>, %arg7: memref<1x1x1xf32, #tpu.memory_space<vmem>>) attributes {dimension_semantics = [#tpu.dimension_semantics<parallel>, #tpu.dimension_semantics<arbitrary>], iteration_bounds = array<i64: 2, 2>, scalar_prefetch = 0 : i64, scratch_operands = 0 : i64, tpu.core_type = #tpu.core_type<tc>, window_params = [{transform_indices = @transform_0, window_bounds = array<i64: 64, 256>}, {transform_indices = @transform_1, window_bounds = array<i64: 64, 256>}, {transform_indices = @transform_2, window_bounds = array<i64: 1, 1, 256>}, {transform_indices = @transform_3, window_bounds = array<i64: 1, 1, 256>}, {transform_indices = @transform_4, window_bounds = array<i64: 1, 1, 256>}, {transform_indices = @transform_5, window_bounds = array<i64: 1, 1, 1>}]} {
    %c0_i32 = arith.constant 0 : i32
    %0 = arith.cmpi eq, %arg1, %c0_i32 : i32
    %1 = arith.extui %0 : i1 to i32
    %c0_i32_0 = arith.constant 0 : i32
    %2 = arith.cmpi ne, %1, %c0_i32_0 : i32
    scf.if %2 {
      %cst_44 = arith.constant 0xFF800000 : f32
      %78 = vector.broadcast %cst_44 : f32 to vector<1x256xf32>
      %c0_45 = arith.constant 0 : index
      %c0_46 = arith.constant 0 : index
      %c0_47 = arith.constant 0 : index
      %79 = vector.load %arg4[%c0_45, %c0_46, %c0_47] : memref<1x1x256xf32, #tpu.memory_space<vmem>>, vector<1x1x256xf32>
      %80 = vector.shape_cast %79 : vector<1x1x256xf32> to vector<1x256xf32>
      %81 = vector.shape_cast %78 : vector<1x256xf32> to vector<1x1x256xf32>
      tpu.vector_store %arg4[%c0_45, %c0_46, %c0_47], %81 {strides = array<i32>} : memref<1x1x256xf32, #tpu.memory_space<vmem>>, vector<1x1x256xf32>,
      %cst_48 = arith.constant 0.000000e+00 : f32
      %82 = vector.broadcast %cst_48 : f32 to vector<1x256xf32>
      %c0_49 = arith.constant 0 : index
      %c0_50 = arith.constant 0 : index
      %c0_51 = arith.constant 0 : index
      %83 = vector.load %arg5[%c0_49, %c0_50, %c0_51] : memref<1x1x256xf32, #tpu.memory_space<vmem>>, vector<1x1x256xf32>
      %84 = vector.shape_cast %83 : vector<1x1x256xf32> to vector<1x256xf32>
      %85 = vector.shape_cast %82 : vector<1x256xf32> to vector<1x1x256xf32>
      tpu.vector_store %arg5[%c0_49, %c0_50, %c0_51], %85 {strides = array<i32>} : memref<1x1x256xf32, #tpu.memory_space<vmem>>, vector<1x1x256xf32>,
      %cst_52 = arith.constant 0.000000e+00 : f32
      %86 = vector.broadcast %cst_52 : f32 to vector<1x256xf32>
      %c0_53 = arith.constant 0 : index
      %c0_54 = arith.constant 0 : index
      %c0_55 = arith.constant 0 : index
      %87 = vector.load %arg6[%c0_53, %c0_54, %c0_55] : memref<1x1x256xf32, #tpu.memory_space<vmem>>, vector<1x1x256xf32>
      %88 = vector.shape_cast %87 : vector<1x1x256xf32> to vector<1x256xf32>
      %89 = vector.shape_cast %86 : vector<1x256xf32> to vector<1x1x256xf32>
      tpu.vector_store %arg6[%c0_53, %c0_54, %c0_55], %89 {strides = array<i32>} : memref<1x1x256xf32, #tpu.memory_space<vmem>>, vector<1x1x256xf32>,
      %cst_56 = arith.constant 0.000000e+00 : f32
      %90 = vector.broadcast %cst_56 : f32 to vector<1x1xf32>
      %c0_57 = arith.constant 0 : index
      %c0_58 = arith.constant 0 : index
      %c0_59 = arith.constant 0 : index
      %91 = vector.load %arg7[%c0_57, %c0_58, %c0_59] : memref<1x1x1xf32, #tpu.memory_space<vmem>>, vector<1x1x1xf32>
      %92 = vector.shape_cast %91 : vector<1x1x1xf32> to vector<1x1xf32>
      %93 = vector.shape_cast %90 : vector<1x1xf32> to vector<1x1x1xf32>
      tpu.vector_store %arg7[%c0_57, %c0_58, %c0_59], %93 {strides = array<i32>} : memref<1x1x1xf32, #tpu.memory_space<vmem>>, vector<1x1x1xf32>,
    } else {
    }
    %c0 = arith.constant 0 : index
    %c0_1 = arith.constant 0 : index
    %3 = vector.load %arg2[%c0, %c0_1] : memref<64x256xf32, #tpu.memory_space<vmem>>, vector<64x256xf32>
    %c0_2 = arith.constant 0 : index
    %c0_3 = arith.constant 0 : index
    %4 = vector.load %arg3[%c0_2, %c0_3] : memref<64x256xf32, #tpu.memory_space<vmem>>, vector<64x256xf32>
    %cst = arith.constant 1.000000e+00 : f32
    %5 = vector.broadcast %cst : f32 to vector<256x1xf32>
    %cst_4 = arith.constant 1.000000e+00 : f32
    %6 = vector.broadcast %cst_4 : f32 to vector<1x64xf32>
    %cst_5 = arith.constant dense<0xFF800000> : vector<64xf32>
    %7 = vector.multi_reduction <maximumf>, %3, %cst_5 [1] : vector<64x256xf32> to vector<64xf32>
    %8 = vector.shape_cast %7 : vector<64xf32> to vector<64x1xf32>
    %9 = vector.broadcast %8 : vector<64x1xf32> to vector<64x256xf32>
    %10 = arith.subf %3, %9 : vector<64x256xf32>
    %11 = math.exp %10 : vector<64x256xf32>
    %cst_6 = arith.constant dense<0.000000e+00> : vector<64x1xf32>
    %12 = tpu.matmul %11, %5, %cst_6 {dimension_numbers = #tpu.dot_dimension_numbers<[1], [0], [0], [1], [0, 0, 1, 1], [], []>} : vector<64x256xf32>, vector<256x1xf32>, vector<64x1xf32> -> vector<64x1xf32>
    %13 = math.log %12 : vector<64x1xf32>
    %14 = arith.addf %13, %8 : vector<64x1xf32>
    %cst_7 = arith.constant dense<0.000000e+00> : vector<64x1xf32>
    %15 = tpu.matmul %4, %5, %cst_7 {dimension_numbers = #tpu.dot_dimension_numbers<[1], [0], [0], [1], [0, 0, 1, 1], [], []>} : vector<64x256xf32>, vector<256x1xf32>, vector<64x1xf32> -> vector<64x1xf32>
    %16 = arith.mulf %4, %3 : vector<64x256xf32>
    %cst_8 = arith.constant dense<0.000000e+00> : vector<64x1xf32>
    %17 = tpu.matmul %16, %5, %cst_8 {dimension_numbers = #tpu.dot_dimension_numbers<[1], [0], [0], [1], [0, 0, 1, 1], [], []>} : vector<64x256xf32>, vector<256x1xf32>, vector<64x1xf32> -> vector<64x1xf32>
    %c0_9 = arith.constant 0 : index
    %c0_10 = arith.constant 0 : index
    %c0_11 = arith.constant 0 : index
    %18 = vector.load %arg7[%c0_9, %c0_10, %c0_11] : memref<1x1x1xf32, #tpu.memory_space<vmem>>, vector<1x1x1xf32>
    %19 = vector.shape_cast %18 : vector<1x1x1xf32> to vector<1x1xf32>
    %20 = arith.mulf %14, %15 : vector<64x1xf32>
    %21 = vector.shape_cast %20 : vector<64x1xf32> to vector<1x64x1xf32>
    %cst_12 = arith.constant dense<0.000000e+00> : vector<1xf32>
    %22 = vector.multi_reduction <add>, %21, %cst_12 [1, 2] : vector<1x64x1xf32> to vector<1xf32>
    %23 = vector.shape_cast %22 : vector<1xf32> to vector<1x1x1xf32>
    %24 = vector.extract %23[0, 0, 0] : f32 from vector<1x1x1xf32>
    %25 = vector.shape_cast %17 : vector<64x1xf32> to vector<1x64x1xf32>
    %cst_13 = arith.constant dense<0.000000e+00> : vector<1xf32>
    %26 = vector.multi_reduction <add>, %25, %cst_13 [1, 2] : vector<1x64x1xf32> to vector<1xf32>
    %27 = vector.shape_cast %26 : vector<1xf32> to vector<1x1x1xf32>
    %28 = vector.extract %27[0, 0, 0] : f32 from vector<1x1x1xf32>
    %cst_14 = arith.constant 2.000000e+00 : f32
    %29 = arith.mulf %cst_14, %28 : f32
    %30 = arith.subf %24, %29 : f32
    %31 = vector.broadcast %30 : f32 to vector<1x1xf32>
    %32 = arith.addf %19, %31 : vector<1x1xf32>
    %c0_15 = arith.constant 0 : index
    %c0_16 = arith.constant 0 : index
    %c0_17 = arith.constant 0 : index
    %33 = vector.load %arg7[%c0_15, %c0_16, %c0_17] : memref<1x1x1xf32, #tpu.memory_space<vmem>>, vector<1x1x1xf32>
    %34 = vector.shape_cast %33 : vector<1x1x1xf32> to vector<1x1xf32>
    %35 = vector.shape_cast %32 : vector<1x1xf32> to vector<1x1x1xf32>
    tpu.vector_store %arg7[%c0_15, %c0_16, %c0_17], %35 {strides = array<i32>} : memref<1x1x1xf32, #tpu.memory_space<vmem>>, vector<1x1x1xf32>,
    %36 = vector.shape_cast %8 : vector<64x1xf32> to vector<1x64x1xf32>
    %cst_18 = arith.constant dense<0xFF800000> : vector<1xf32>
    %37 = vector.multi_reduction <maximumf>, %36, %cst_18 [1, 2] : vector<1x64x1xf32> to vector<1xf32>
    %38 = vector.shape_cast %37 : vector<1xf32> to vector<1x1x1xf32>
    %39 = vector.extract %38[0, 0, 0] : f32 from vector<1x1x1xf32>
    %cst_19 = arith.constant dense<0xFF800000> : vector<256xf32>
    %40 = vector.multi_reduction <maximumf>, %3, %cst_19 [0] : vector<64x256xf32> to vector<256xf32>
    %41 = vector.shape_cast %40 : vector<256xf32> to vector<1x256xf32>
    %c0_20 = arith.constant 0 : index
    %c0_21 = arith.constant 0 : index
    %c0_22 = arith.constant 0 : index
    %42 = vector.load %arg4[%c0_20, %c0_21, %c0_22] : memref<1x1x256xf32, #tpu.memory_space<vmem>>, vector<1x1x256xf32>
    %43 = vector.shape_cast %42 : vector<1x1x256xf32> to vector<1x256xf32>
    %44 = arith.maximumf %43, %41 : vector<1x256xf32>
    %45 = vector.broadcast %39 : f32 to vector<64x1xf32>
    %46 = arith.subf %8, %45 : vector<64x1xf32>
    %47 = math.exp %46 : vector<64x1xf32>
    %48 = vector.broadcast %47 : vector<64x1xf32> to vector<64x256xf32>
    %49 = arith.mulf %11, %48 : vector<64x256xf32>
    %cst_23 = arith.constant dense<0.000000e+00> : vector<1x256xf32>
    %50 = tpu.matmul %6, %49, %cst_23 {dimension_numbers = #tpu.dot_dimension_numbers<[1], [0], [0], [1], [0, 0, 1, 1], [], []>} : vector<1x64xf32>, vector<64x256xf32>, vector<1x256xf32> -> vector<1x256xf32>
    %51 = vector.broadcast %39 : f32 to vector<1x256xf32>
    %52 = arith.subf %51, %44 : vector<1x256xf32>
    %cst_24 = arith.constant 8.000000e+01 : f32
    %53 = vector.broadcast %cst_24 : f32 to vector<1x256xf32>
    %54 = arith.minimumf %52, %53 : vector<1x256xf32>
    %55 = math.exp %54 : vector<1x256xf32>
    %c0_25 = arith.constant 0 : index
    %c0_26 = arith.constant 0 : index
    %c0_27 = arith.constant 0 : index
    %56 = vector.load %arg5[%c0_25, %c0_26, %c0_27] : memref<1x1x256xf32, #tpu.memory_space<vmem>>, vector<1x1x256xf32>
    %57 = vector.shape_cast %56 : vector<1x1x256xf32> to vector<1x256xf32>
    %c0_28 = arith.constant 0 : index
    %c0_29 = arith.constant 0 : index
    %c0_30 = arith.constant 0 : index
    %58 = vector.load %arg4[%c0_28, %c0_29, %c0_30] : memref<1x1x256xf32, #tpu.memory_space<vmem>>, vector<1x1x256xf32>
    %59 = vector.shape_cast %58 : vector<1x1x256xf32> to vector<1x256xf32>
    %60 = arith.subf %59, %44 : vector<1x256xf32>
    %61 = math.exp %60 : vector<1x256xf32>
    %62 = arith.mulf %57, %61 : vector<1x256xf32>
    %63 = arith.mulf %50, %55 : vector<1x256xf32>
    %64 = arith.addf %62, %63 : vector<1x256xf32>
    %c0_31 = arith.constant 0 : index
    %c0_32 = arith.constant 0 : index
    %c0_33 = arith.constant 0 : index
    %65 = vector.load %arg5[%c0_31, %c0_32, %c0_33] : memref<1x1x256xf32, #tpu.memory_space<vmem>>, vector<1x1x256xf32>
    %66 = vector.shape_cast %65 : vector<1x1x256xf32> to vector<1x256xf32>
    %67 = vector.shape_cast %64 : vector<1x256xf32> to vector<1x1x256xf32>
    tpu.vector_store %arg5[%c0_31, %c0_32, %c0_33], %67 {strides = array<i32>} : memref<1x1x256xf32, #tpu.memory_space<vmem>>, vector<1x1x256xf32>,
    %c0_34 = arith.constant 0 : index
    %c0_35 = arith.constant 0 : index
    %c0_36 = arith.constant 0 : index
    %68 = vector.load %arg4[%c0_34, %c0_35, %c0_36] : memref<1x1x256xf32, #tpu.memory_space<vmem>>, vector<1x1x256xf32>
    %69 = vector.shape_cast %68 : vector<1x1x256xf32> to vector<1x256xf32>
    %70 = vector.shape_cast %44 : vector<1x256xf32> to vector<1x1x256xf32>
    tpu.vector_store %arg4[%c0_34, %c0_35, %c0_36], %70 {strides = array<i32>} : memref<1x1x256xf32, #tpu.memory_space<vmem>>, vector<1x1x256xf32>,
    %c0_37 = arith.constant 0 : index
    %c0_38 = arith.constant 0 : index
    %c0_39 = arith.constant 0 : index
    %71 = vector.load %arg6[%c0_37, %c0_38, %c0_39] : memref<1x1x256xf32, #tpu.memory_space<vmem>>, vector<1x1x256xf32>
    %72 = vector.shape_cast %71 : vector<1x1x256xf32> to vector<1x256xf32>
    %cst_40 = arith.constant dense<0.000000e+00> : vector<1x256xf32>
    %73 = tpu.matmul %6, %4, %cst_40 {dimension_numbers = #tpu.dot_dimension_numbers<[1], [0], [0], [1], [0, 0, 1, 1], [], []>} : vector<1x64xf32>, vector<64x256xf32>, vector<1x256xf32> -> vector<1x256xf32>
    %74 = arith.addf %72, %73 : vector<1x256xf32>
    %c0_41 = arith.constant 0 : index
    %c0_42 = arith.constant 0 : index
    %c0_43 = arith.constant 0 : index
    %75 = vector.load %arg6[%c0_41, %c0_42, %c0_43] : memref<1x1x256xf32, #tpu.memory_space<vmem>>, vector<1x1x256xf32>
    %76 = vector.shape_cast %75 : vector<1x1x256xf32> to vector<1x256xf32>
    %77 = vector.shape_cast %74 : vector<1x256xf32> to vector<1x1x256xf32>
    tpu.vector_store %arg6[%c0_41, %c0_42, %c0_43], %77 {strides = array<i32>} : memref<1x1x256xf32, #tpu.memory_space<vmem>>, vector<1x1x256xf32>,
    return
  }
  func.func @transform_0(%arg0: i32, %arg1: i32) -> (i32, i32) {
    %c2_i32 = arith.constant 2 : i32
    %0 = arith.muli %arg0, %c2_i32 : i32
    %1 = arith.addi %0, %arg1 : i32
    %c0_i32 = arith.constant 0 : i32
    %c0_i32_0 = arith.constant 0 : i32
    return %1, %c0_i32 : i32, i32
  }
  func.func @transform_1(%arg0: i32, %arg1: i32) -> (i32, i32) {
    %c2_i32 = arith.constant 2 : i32
    %0 = arith.muli %arg0, %c2_i32 : i32
    %1 = arith.addi %0, %arg1 : i32
    %c0_i32 = arith.constant 0 : i32
    %c0_i32_0 = arith.constant 0 : i32
    return %1, %c0_i32 : i32, i32
  }
  func.func @transform_2(%arg0: i32, %arg1: i32) -> (i32, i32, i32) {
    %c0_i32 = arith.constant 0 : i32
    %c0_i32_0 = arith.constant 0 : i32
    %c0_i32_1 = arith.constant 0 : i32
    return %arg0, %c0_i32, %c0_i32_0 : i32, i32, i32
  }
  func.func @transform_3(%arg0: i32, %arg1: i32) -> (i32, i32, i32) {
    %c0_i32 = arith.constant 0 : i32
    %c0_i32_0 = arith.constant 0 : i32
    %c0_i32_1 = arith.constant 0 : i32
    return %arg0, %c0_i32, %c0_i32_0 : i32, i32, i32
  }
  func.func @transform_4(%arg0: i32, %arg1: i32) -> (i32, i32, i32) {
    %c0_i32 = arith.constant 0 : i32
    %c0_i32_0 = arith.constant 0 : i32
    %c0_i32_1 = arith.constant 0 : i32
    return %arg0, %c0_i32, %c0_i32_0 : i32, i32, i32
  }
  func.func @transform_5(%arg0: i32, %arg1: i32) -> (i32, i32, i32) {
    %c0_i32 = arith.constant 0 : i32
    %c0_i32_0 = arith.constant 0 : i32
    %c0_i32_1 = arith.constant 0 : i32
    return %arg0, %c0_i32, %c0_i32_0 : i32, i32, i32
  }
}

</mosaic_0001>

<llo_original>
// kernel: tpu_custom_call.1
$region0: #{tpu_custom_call.1}
  #allocation0 [shape = 'u32[]', space=smem, size = 0x4, offset = 0x4, fixed_abs, tag = 'smem constant byte address 0x4 - core index']
  #allocation1 [shape = 'u32[144,128]{1,0:T(1,128)}', space=vmem, size = 0x12000, scoped, tag = 'internal scratch']
  %s0 = inlined_call_operand.hbm [shape: f32[256,256], index: 0, kind: input, shape index: {}]
  %s1 = inlined_call_operand.hbm [shape: f32[256,256], index: 1, kind: input, shape index: {}]
  %s2 = inlined_call_operand.hbm [shape: f32[2,1,256], index: 2, kind: output, shape index: {0}]
  %s3 = inlined_call_operand.hbm [shape: f32[2,1,256], index: 3, kind: output, shape index: {1}]
  %s4 = inlined_call_operand.hbm [shape: f32[2,1,256], index: 4, kind: output, shape index: {2}]
  %s5 = inlined_call_operand.vmem [shape: f32[2,1,1], index: 5, kind: output, shape index: {3}]
  %6 = xla_tuple %s2, %s3, %s4, %s5
  %s7 = sld [smem:[#allocation0]]
  $region77: #{tpu_custom_call.1} parent=0
    _
  %s9 = ssub.s32 1, %s7
  %s10 = scalar_select 0, %s9, %s7
  $region1: #{tpu_custom_call.1} parent=0
    #allocation2 [shape = 'u8[131072]{0}', space=vmem, size = 0x20000, scoped, tag = 'input window, operand 0']
    #allocation3 [shape = 's32[2]{0}', space=sflag, size = 0x8, scoped, tag = 'scoped memory for tpu_custom_call.1']
    #allocation4 [shape = 's32[2]{0}', space=sflag, size = 0x8, scoped, tag = 'scoped memory for tpu_custom_call.1']
    #allocation5 [shape = 'u8[131072]{0}', space=vmem, size = 0x20000, scoped, tag = 'input window, operand 1']
    #allocation6 [shape = 's32[2]{0}', space=sflag, size = 0x8, scoped, tag = 'scoped memory for tpu_custom_call.1']
    #allocation7 [shape = 'u8[2048]{0}', space=vmem, size = 0x800, scoped, tag = 'output window, operand 0']
    #allocation8 [shape = 'u8[2048]{0}', space=vmem, size = 0x800, scoped, tag = 'output window, operand 1']
    #allocation9 [shape = 's32[2]{0}', space=sflag, size = 0x8, scoped, tag = 'scoped memory for tpu_custom_call.1']
    #allocation10 [shape = 'u8[2048]{0}', space=vmem, size = 0x800, scoped, tag = 'output window, operand 2']
    %11 = vsyncpa [#allocation3], 0
    %s12 = scalar_lea.sflag [#allocation3], 1
    %13 = vsyncpa %s12, 0
    %14 = vsyncpa [#allocation6], 0
    %s15 = scalar_lea.sflag [#allocation6], 1
    %16 = vsyncpa %s15, 0
    %17 = vsyncpa [#allocation4], 0
    %s18 = scalar_lea.sflag [#allocation4], 1
    %19 = vsyncpa %s18, 0
    %20 = vsyncpa [#allocation9], 0
    %s21 = scalar_lea.sflag [#allocation9], 1
    %22 = vsyncpa %s21, 0
    loop: start=0, step=1, limit=6
    $region2: #{tpu_custom_call.1} parent=1 // loop_pre_header
      _
    $region3: #{tpu_custom_call.1} parent=1 // loop_header
      %s24 = sphi 0, %s28
      %p25 = scmp.ge.s32.totalorder %s24, 6
      %s31 = sphi 0, %s43
      %s32 = sphi 0, %s39
      %s33 = sphi 0, %s31
      %s34 = sphi 0, %s32
      %s35 = sphi 0, %s33
      %s36 = sphi 0, %s34
      %s50 = sphi 0, %s52
      %s53 = sphi 0, %s50
      %s54 = sphi 0, %s53
      %s70 = sphi 0, %s54
      %s80 = sphi 0, %s82
      %s83 = sphi 0, %s80
      %s84 = sphi 0, %s83
      %s100 = sphi 0, %s84
      %s106 = sphi 0, %s108
      %s109 = sphi 0, %s106
      %s110 = sphi 0, %s109
      %s126 = sphi 0, %s110
      %s132 = sphi 0, %s134
      %s135 = sphi 0, %s132
      %s136 = sphi 0, %s135
      %s152 = sphi 0, %s136
      %s158 = sphi 0, %s160
      %s161 = sphi 0, %s158
      %s162 = sphi 0, %s161
      %s178 = sphi 0, %s162
      %s184 = sphi 0, %s186
      %s187 = sphi 0, %s184
      %s188 = sphi 0, %s187
      %s204 = sphi 0, %s188
    $region4: #{tpu_custom_call.1} parent=1 // loop_header_branch
      %27 = sbr.rel (%p25) target = $region8
    $region5: #{tpu_custom_call.1} parent=1 // loop_body
      %s29 = ssub.s32 %s24, 1
      %s30 = ssub.s32 %s24, 2
      %s37 = sadd.s32 1, %s32
      %p38 = scmp.ge.s32.totalorder %s37, 2
      %s39 = scalar_select %p38, 0, %s37
      %s40 = sadd.s32 1, %s31
      %s41 = scalar_select %p38, %s40, %s31
      %p42 = scmp.ge.s32.totalorder %s41, 2
      %s43 = scalar_select %p42, 0, %s41
      %s44 = smul.u32 %s31, 2
      %s45 = sadd.s32 %s44, %s32
      %s46 = smul.u32 %s43, 2
      %s47 = sadd.s32 %s46, %s39
      %s48 = ssub.s32 %s45, %s47
      %p49 = scmp.eq.s32.totalorder %s48, 0
      %s51 = sadd.s32 %s50, 1
      %s52 = scalar_select %p49, %s50, %s51
      %p55 = pneg %p49
      %p56 = scmp.eq.s32.totalorder %s24, 3
      %p57 = por %p55, %p56
      %p58 = scmp.ne.s32.totalorder %s50, %s53
      %p59 = scmp.eq.s32.totalorder %s24, 0
      %p60 = por %p58, %p59
      %p61 = scmp.ne.s32.totalorder %s50, %s53
      %p62 = scmp.eq.s32.totalorder %s29, 3
      %p63 = por %p61, %p62
      %p64 = scmp.ne.s32.totalorder %s53, %s54
      %p65 = scmp.eq.s32.totalorder %s29, 0
      %p66 = por %p64, %p65
      %p67 = scmp.ne.s32.totalorder %s53, %s54
      %p68 = scmp.eq.s32.totalorder %s30, 3
      %p69 = por %p67, %p68
      %p71 = scmp.ne.s32.totalorder %s54, %s70
      %p72 = scmp.eq.s32.totalorder %s30, 0
      %p73 = por %p71, %p72
      %s74 = smul.u32 %s31, 2
      %s75 = sadd.s32 %s74, %s32
      %s76 = smul.u32 %s43, 2
      %s77 = sadd.s32 %s76, %s39
      %s78 = ssub.s32 %s75, %s77
      %p79 = scmp.eq.s32.totalorder %s78, 0
      %s81 = sadd.s32 %s80, 1
      %s82 = scalar_select %p79, %s80, %s81
      %p85 = pneg %p79
      %p86 = scmp.eq.s32.totalorder %s24, 3
      %p87 = por %p85, %p86
      %p88 = scmp.ne.s32.totalorder %s80, %s83
      %p89 = scmp.eq.s32.totalorder %s24, 0
      %p90 = por %p88, %p89
      %p91 = scmp.ne.s32.totalorder %s80, %s83
      %p92 = scmp.eq.s32.totalorder %s29, 3
      %p93 = por %p91, %p92
      %p94 = scmp.ne.s32.totalorder %s83, %s84
      %p95 = scmp.eq.s32.totalorder %s29, 0
      %p96 = por %p94, %p95
      %p97 = scmp.ne.s32.totalorder %s83, %s84
      %p98 = scmp.eq.s32.totalorder %s30, 3
      %p99 = por %p97, %p98
      %p101 = scmp.ne.s32.totalorder %s84, %s100
      %p102 = scmp.eq.s32.totalorder %s30, 0
      %p103 = por %p101, %p102
      %s104 = ssub.s32 %s31, %s43
      %p105 = scmp.eq.s32.totalorder %s104, 0
      %s107 = sadd.s32 %s106, 1
      %s108 = scalar_select %p105, %s106, %s107
      %p111 = pneg %p105
      %p112 = scmp.eq.s32.totalorder %s24, 3
      %p113 = por %p111, %p112
      %p114 = scmp.ne.s32.totalorder %s106, %s109
      %p115 = scmp.eq.s32.totalorder %s24, 0
      %p116 = por %p114, %p115
      %p117 = scmp.ne.s32.totalorder %s106, %s109
      %p118 = scmp.eq.s32.totalorder %s29, 3
      %p119 = por %p117, %p118
      %p120 = scmp.ne.s32.totalorder %s109, %s110
      %p121 = scmp.eq.s32.totalorder %s29, 0
      %p122 = por %p120, %p121
      %p123 = scmp.ne.s32.totalorder %s109, %s110
      %p124 = scmp.eq.s32.totalorder %s30, 3
      %p125 = por %p123, %p124
      %p127 = scmp.ne.s32.totalorder %s110, %s126
      %p128 = scmp.eq.s32.totalorder %s30, 0
      %p129 = por %p127, %p128
      %s130 = ssub.s32 %s31, %s43
      %p131 = scmp.eq.s32.totalorder %s130, 0
      %s133 = sadd.s32 %s132, 1
      %s134 = scalar_select %p131, %s132, %s133
      %p137 = pneg %p131
      %p138 = scmp.eq.s32.totalorder %s24, 3
      %p139 = por %p137, %p138
      %p140 = scmp.ne.s32.totalorder %s132, %s135
      %p141 = scmp.eq.s32.totalorder %s24, 0
      %p142 = por %p140, %p141
      %p143 = scmp.ne.s32.totalorder %s132, %s135
      %p144 = scmp.eq.s32.totalorder %s29, 3
      %p145 = por %p143, %p144
      %p146 = scmp.ne.s32.totalorder %s135, %s136
      %p147 = scmp.eq.s32.totalorder %s29, 0
      %p148 = por %p146, %p147
      %p149 = scmp.ne.s32.totalorder %s135, %s136
      %p150 = scmp.eq.s32.totalorder %s30, 3
      %p151 = por %p149, %p150
      %p153 = scmp.ne.s32.totalorder %s136, %s152
      %p154 = scmp.eq.s32.totalorder %s30, 0
      %p155 = por %p153, %p154
      %s156 = ssub.s32 %s31, %s43
      %p157 = scmp.eq.s32.totalorder %s156, 0
      %s159 = sadd.s32 %s158, 1
      %s160 = scalar_select %p157, %s158, %s159
      %p163 = pneg %p157
      %p164 = scmp.eq.s32.totalorder %s24, 3
      %p165 = por %p163, %p164
      %p166 = scmp.ne.s32.totalorder %s158, %s161
      %p167 = scmp.eq.s32.totalorder %s24, 0
      %p168 = por %p166, %p167
      %p169 = scmp.ne.s32.totalorder %s158, %s161
      %p170 = scmp.eq.s32.totalorder %s29, 3
      %p171 = por %p169, %p170
      %p172 = scmp.ne.s32.totalorder %s161, %s162
      %p173 = scmp.eq.s32.totalorder %s29, 0
      %p174 = por %p172, %p173
      %p175 = scmp.ne.s32.totalorder %s161, %s162
      %p176 = scmp.eq.s32.totalorder %s30, 3
      %p177 = por %p175, %p176
      %p179 = scmp.ne.s32.totalorder %s162, %s178
      %p180 = scmp.eq.s32.totalorder %s30, 0
      %p181 = por %p179, %p180
      %s182 = ssub.s32 %s31, %s43
      %p183 = scmp.eq.s32.totalorder %s182, 0
      %s185 = sadd.s32 %s184, 1
      %s186 = scalar_select %p183, %s184, %s185
      %p189 = pneg %p183
      %p190 = scmp.eq.s32.totalorder %s24, 3
      %p191 = por %p189, %p190
      %p192 = scmp.ne.s32.totalorder %s184, %s187
      %p193 = scmp.eq.s32.totalorder %s24, 0
      %p194 = por %p192, %p193
      %p195 = scmp.ne.s32.totalorder %s184, %s187
      %p196 = scmp.eq.s32.totalorder %s29, 3
      %p197 = por %p195, %p196
      %p198 = scmp.ne.s32.totalorder %s187, %s188
      %p199 = scmp.eq.s32.totalorder %s29, 0
      %p200 = por %p198, %p199
      %p201 = scmp.ne.s32.totalorder %s187, %s188
      %p202 = scmp.eq.s32.totalorder %s30, 3
      %p203 = por %p201, %p202
      %p205 = scmp.ne.s32.totalorder %s188, %s204
      %p206 = scmp.eq.s32.totalorder %s30, 0
      %p207 = por %p205, %p206
      %p208 = scmp.le.s32.totalorder 1, %s24
      %p209 = scmp.lt.s32.totalorder %s24, 5
      %p210 = pnand %p208, %p209
      %p211 = pneg %p210
      // Predicated region
      $region9: #{tpu_custom_call.1} parent=5 // pred_check
        _
      $region10: #{tpu_custom_call.1} parent=5 // pred_check_branch
        %213 = sbr.rel (%p210) target = $region12
      $region11: #{tpu_custom_call.1} parent=5 // pred_region
        %s214 = ssub.s32 %s24, 1
      $region12: #{tpu_custom_call.1} parent=5 // pred_fallthru
        _
      %p215 = scmp.lt.s32.totalorder %s24, 4
      // Predicated region
      $region13: #{tpu_custom_call.1} parent=5 // pred_check
        %p216 = pneg %p215
      $region14: #{tpu_custom_call.1} parent=5 // pred_check_branch
        %218 = sbr.rel (%p216) target = $region16
      $region15: #{tpu_custom_call.1} parent=5 // pred_region
        // Predicated region
        $region17: #{tpu_custom_call.1} parent=15 // pred_check
          %p219 = pneg %p60
        $region18: #{tpu_custom_call.1} parent=15 // pred_check_branch
          %221 = sbr.rel (%p219) target = $region20
        $region19: #{tpu_custom_call.1} parent=15 // pred_region
          %s222 = sand.u32 %s50, 1
          %s223 = scalar_lea.sflag [#allocation3], %s222
          %s224 = sand.u32 %s50, 1
          %s225 = smul.addr %s224, 128
          %s226 = scalar_lea.vmem [#allocation2], %s225
          %s227 = smul.u32 %s31, 2
          %s228 = sadd.s32 %s227, %s32
          %s229 = smul.u32 8, %s228
          %s231 = ssub.s32 2048, 2048
          %232 = vsyncadd %s223, %s231
          %s233 = smul.addr %s229, 2
          %s234 = smul.addr %s233, 128
          %s235 = scalar_lea.hbm %s0, %s234
          %s236 = sshll.u32 %s226, 4
          %s237 = int_to_ptr.vmem [resolvable:$true] %s236
          %242 = dma.hbm_to_vmem [thread:$0]  %s235, 2048, %s237, %s223, 256, 256, 16
        $region20: #{tpu_custom_call.1} parent=15 // pred_fallthru
          _
        // Predicated region
        $region21: #{tpu_custom_call.1} parent=15 // pred_check
          %p243 = pneg %p90
        $region22: #{tpu_custom_call.1} parent=15 // pred_check_branch
          %245 = sbr.rel (%p243) target = $region24
        $region23: #{tpu_custom_call.1} parent=15 // pred_region
          %s246 = sand.u32 %s80, 1
          %s247 = scalar_lea.sflag [#allocation6], %s246
          %s248 = sand.u32 %s80, 1
          %s249 = smul.addr %s248, 128
          %s250 = scalar_lea.vmem [#allocation5], %s249
          %s251 = smul.u32 %s31, 2
          %s252 = sadd.s32 %s251, %s32
          %s253 = smul.u32 8, %s252
          %s255 = ssub.s32 2048, 2048
          %256 = vsyncadd %s247, %s255
          %s257 = smul.addr %s253, 2
          %s258 = smul.addr %s257, 128
          %s259 = scalar_lea.hbm %s1, %s258
          %s260 = sshll.u32 %s250, 4
          %s261 = int_to_ptr.vmem [resolvable:$true] %s260
          %266 = dma.hbm_to_vmem [thread:$0]  %s259, 2048, %s261, %s247, 256, 256, 16
        $region24: #{tpu_custom_call.1} parent=15 // pred_fallthru
          _
      $region16: #{tpu_custom_call.1} parent=5 // pred_fallthru
        _
      %p267 = scmp.le.s32.totalorder 1, %s24
      %p268 = scmp.lt.s32.totalorder %s24, 5
      %p269 = pnand %p267, %p268
      %p270 = pneg %p269
      // Predicated region
      $region25: #{tpu_custom_call.1} parent=5 // pred_check
        _
      $region26: #{tpu_custom_call.1} parent=5 // pred_check_branch
        %272 = sbr.rel (%p269) target = $region28
      $region27: #{tpu_custom_call.1} parent=5 // pred_region
        %s273 = ssub.s32 %s24, 1
        %s274 = sand.u32 %s53, 1
        %s275 = scalar_lea.sflag [#allocation3], %s274
        %s276 = sand.u32 %s53, 1
        %s277 = smul.addr %s276, 128
        %s278 = scalar_lea.vmem [#allocation2], %s277
        // Predicated region
        $region29: #{tpu_custom_call.1} parent=27 // pred_check
          %p279 = pneg %p66
        $region30: #{tpu_custom_call.1} parent=27 // pred_check_branch
          %281 = sbr.rel (%p279) target = $region32
        $region31: #{tpu_custom_call.1} parent=27 // pred_region
          %282 = dma.done %s275, 2048
        $region32: #{tpu_custom_call.1} parent=27 // pred_fallthru
          _
        %s283 = sand.u32 %s83, 1
        %s284 = scalar_lea.sflag [#allocation6], %s283
        %s285 = sand.u32 %s83, 1
        %s286 = smul.addr %s285, 128
        %s287 = scalar_lea.vmem [#allocation5], %s286
        // Predicated region
        $region33: #{tpu_custom_call.1} parent=27 // pred_check
          %p288 = pneg %p96
        $region34: #{tpu_custom_call.1} parent=27 // pred_check_branch
          %290 = sbr.rel (%p288) target = $region36
        $region35: #{tpu_custom_call.1} parent=27 // pred_region
          %291 = dma.done %s284, 2048
        $region36: #{tpu_custom_call.1} parent=27 // pred_fallthru
          _
        %s292 = sand.u32 %s53, 1
        %s293 = scalar_lea.sflag [#allocation3], %s292
        %s294 = sand.u32 %s53, 1
        %s295 = smul.addr %s294, 128
        %s296 = scalar_lea.vmem [#allocation2], %s295
        %p297 = pneg %p66
        %p298 = pneg %p63
        %s299 = sand.u32 %s83, 1
        %s300 = scalar_lea.sflag [#allocation6], %s299
        %s301 = sand.u32 %s83, 1
        %s302 = smul.addr %s301, 128
        %s303 = scalar_lea.vmem [#allocation5], %s302
        %p304 = pneg %p96
        %p305 = pneg %p93
        %p306 = pneg %p122
        %p307 = pneg %p119
        %s308 = sand.u32 %s109, 1
        %s309 = scalar_lea.sflag [#allocation4], %s308
        %s310 = sand.u32 %s109, 1
        %s311 = smul.addr %s310, 2
        %s312 = scalar_lea.vmem [#allocation7], %s311
        %p313 = pneg %p148
        %p314 = pneg %p145
        %s315 = sand.u32 %s29, 1
        %s316 = scalar_lea.sflag [#allocation9], %s315
        %s317 = sand.u32 %s135, 1
        %s318 = smul.addr %s317, 2
        %s319 = scalar_lea.vmem [#allocation8], %s318
        %p320 = pneg %p174
        %p321 = pneg %p171
        %s322 = sand.u32 %s29, 1
        %s323 = scalar_lea.sflag [#allocation9], %s322
        %s324 = sand.u32 %s161, 1
        %s325 = smul.addr %s324, 2
        %s326 = scalar_lea.vmem [#allocation10], %s325
        %p327 = pneg %p200
        %p328 = pneg %p197
        %p329 = scmp.lt.s32.totalorder %s33, 1
        %s330 = scalar_select %p329, %s33, 1
        %s331 = scalar_lea.vmem %s5, %s330
        %s332 = smul.u32 %s33, 2
        %s333 = sadd.s32 %s332, %s34
        %s334 = smul.u32 8, %s333
        %s335 = smul.u32 %s33, 2
        %s336 = sadd.s32 %s335, %s34
        %s337 = smul.u32 8, %s336
        %p338 = scmp.lt.s32.totalorder %s33, 1
        %s339 = scalar_select %p338, %s33, 1
        %s340 = scalar_lea.vmem %s5, %s339
        %p341 = scmp.eq.s32.totalorder %s34, 0
        // Predicated region
        $region37: #{tpu_custom_call.1} parent=27 // pred_check
          %p342 = pneg %p341
        $region38: #{tpu_custom_call.1} parent=27 // pred_check_branch
          %344 = sbr.rel (%p342) target = $region40
        $region39: #{tpu_custom_call.1} parent=27 // pred_region
          %v345 = vlaneseq
          %vm346 = vcmp.ge.s32.totalorder %v345, 0
          %vm347 = vcmp.lt.s32.totalorder %v345, 256
          %vm348 = vmand %vm346, %vm347
          %349 = vst.msk [vmem:[%s312] sm:$0x3] %vm348, -inf
          %350 = vst.msk [vmem:[%s319] sm:$0x3] %vm348, 0.0
          %351 = vst.msk [vmem:[%s326] sm:$0x3] %vm348, 0.0
          %vm352 = vcmask 0
          %353 = vst.msk [vmem:[%s340] sm:$0x1] %vm352, 0.0
        $region40: #{tpu_custom_call.1} parent=27 // pred_fallthru
          _
        %v354 = vld [vmem:[%s278] sm:$0xff]
        %v355 = vld [vmem:[%s278 + $0x8] sm:$0xff]
        %v356 = vld [vmem:[%s278 + $0x10] sm:$0xff]
        %v357 = vld [vmem:[%s278 + $0x18] sm:$0xff]
        %v358 = vld [vmem:[%s278 + $0x20] sm:$0xff]
        %v359 = vld [vmem:[%s278 + $0x28] sm:$0xff]
        %v360 = vld [vmem:[%s278 + $0x30] sm:$0xff]
        %v361 = vld [vmem:[%s278 + $0x38] sm:$0xff]
        %v362 = vld [vmem:[%s278 + $0x40] sm:$0xff]
        %v363 = vld [vmem:[%s278 + $0x48] sm:$0xff]
        %v364 = vld [vmem:[%s278 + $0x50] sm:$0xff]
        %v365 = vld [vmem:[%s278 + $0x58] sm:$0xff]
        %v366 = vld [vmem:[%s278 + $0x60] sm:$0xff]
        %v367 = vld [vmem:[%s278 + $0x68] sm:$0xff]
        %v368 = vld [vmem:[%s278 + $0x70] sm:$0xff]
        %v369 = vld [vmem:[%s278 + $0x78] sm:$0xff]
        %v370 = vld [vmem:[%s287] sm:$0xff]
        %v371 = vld [vmem:[%s287 + $0x8] sm:$0xff]
        %v372 = vld [vmem:[%s287 + $0x10] sm:$0xff]
        %v373 = vld [vmem:[%s287 + $0x18] sm:$0xff]
        %v374 = vld [vmem:[%s287 + $0x20] sm:$0xff]
        %v375 = vld [vmem:[%s287 + $0x28] sm:$0xff]
        %v376 = vld [vmem:[%s287 + $0x30] sm:$0xff]
        %v377 = vld [vmem:[%s287 + $0x38] sm:$0xff]
        %v378 = vld [vmem:[%s287 + $0x40] sm:$0xff]
        %v379 = vld [vmem:[%s287 + $0x48] sm:$0xff]
        %v380 = vld [vmem:[%s287 + $0x50] sm:$0xff]
        %v381 = vld [vmem:[%s287 + $0x58] sm:$0xff]
        %v382 = vld [vmem:[%s287 + $0x60] sm:$0xff]
        %v383 = vld [vmem:[%s287 + $0x68] sm:$0xff]
        %v384 = vld [vmem:[%s287 + $0x70] sm:$0xff]
        %v385 = vld [vmem:[%s287 + $0x78] sm:$0xff]
        %v386 = vmax.f32 %v354, %v355
        %387 = vmax.xlane.f32.xlu0 %v386
        %v388 = vpop.xlane.xlu0 %387
        %v389 = vmax.f32 %v356, %v357
        %390 = vmax.xlane.f32.xlu0 %v389
        %v391 = vpop.xlane.xlu0 %390
        %v392 = vmax.f32 %v358, %v359
        %393 = vmax.xlane.f32.xlu0 %v392
        %v394 = vpop.xlane.xlu0 %393
        %v395 = vmax.f32 %v360, %v361
        %396 = vmax.xlane.f32.xlu0 %v395
        %v397 = vpop.xlane.xlu0 %396
        %v398 = vmax.f32 %v362, %v363
        %399 = vmax.xlane.f32.xlu0 %v398
        %v400 = vpop.xlane.xlu0 %399
        %v401 = vmax.f32 %v364, %v365
        %402 = vmax.xlane.f32.xlu0 %v401
        %v403 = vpop.xlane.xlu0 %402
        %v404 = vmax.f32 %v366, %v367
        %405 = vmax.xlane.f32.xlu0 %v404
        %v406 = vpop.xlane.xlu0 %405
        %v407 = vmax.f32 %v368, %v369
        %408 = vmax.xlane.f32.xlu0 %v407
        %v409 = vpop.xlane.xlu0 %408
        %v410 = vsub.f32 %v354, %v388
        %v411 = vsub.f32 %v355, %v388
        %v412 = vsub.f32 %v356, %v391
        %v413 = vsub.f32 %v357, %v391
        %v414 = vsub.f32 %v358, %v394
        %v415 = vsub.f32 %v359, %v394
        %v416 = vsub.f32 %v360, %v397
        %v417 = vsub.f32 %v361, %v397
        %v418 = vsub.f32 %v362, %v400
        %v419 = vsub.f32 %v363, %v400
        %v420 = vsub.f32 %v364, %v403
        %v421 = vsub.f32 %v365, %v403
        %v422 = vsub.f32 %v366, %v406
        %v423 = vsub.f32 %v367, %v406
        %v424 = vsub.f32 %v368, %v409
        %v425 = vsub.f32 %v369, %v409
        %v426 = vmul.f32 %v410, 1.442695
        %v427 = vpow.pop %v426
        %v428 = vmul.f32 %v411, 1.442695
        %v429 = vpow.pop %v428
        %v430 = vmul.f32 %v412, 1.442695
        %v431 = vpow.pop %v430
        %v432 = vmul.f32 %v413, 1.442695
        %v433 = vpow.pop %v432
        %v434 = vmul.f32 %v414, 1.442695
        %v435 = vpow.pop %v434
        %v436 = vmul.f32 %v415, 1.442695
        %v437 = vpow.pop %v436
        %v438 = vmul.f32 %v416, 1.442695
        %v439 = vpow.pop %v438
        %v440 = vmul.f32 %v417, 1.442695
        %v441 = vpow.pop %v440
        %v442 = vmul.f32 %v418, 1.442695
        %v443 = vpow.pop %v442
        %v444 = vmul.f32 %v419, 1.442695
        %v445 = vpow.pop %v444
        %v446 = vmul.f32 %v420, 1.442695
        %v447 = vpow.pop %v446
        %v448 = vmul.f32 %v421, 1.442695
        %v449 = vpow.pop %v448
        %v450 = vmul.f32 %v422, 1.442695
        %v451 = vpow.pop %v450
        %v452 = vmul.f32 %v423, 1.442695
        %v453 = vpow.pop %v452
        %v454 = vmul.f32 %v424, 1.442695
        %v455 = vpow.pop %v454
        %v456 = vmul.f32 %v425, 1.442695
        %v457 = vpow.pop %v456
        %458 = vmatprep.subr.mxu0 0.0
        %459 = vmatpush1.msra.mxu0 1.0
        %460 = vmatprep.subr.mxu0 0.0
        %461 = vmatpush1.msra.mxu0 1.0
        %462 = vmatprep.subr.mxu0 0.0
        %463 = vmatpush1.msra.mxu0 1.0
        %464 = vmatprep.subr.mxu0 0.0
        %465 = vmatpush1.msra.mxu0 1.0
        %466 = vmatprep.subr.mxu0 0.0
        %467 = vmatpush1.msra.mxu0 1.0
        %468 = vmatprep.subr.mxu0 0.0
        %469 = vmatpush1.msra.mxu0 1.0
        %470 = vmatprep.subr.mxu0 0.0
        %471 = vmatpush1.msra.mxu0 1.0
        %472 = vmatprep.subr.mxu0 0.0
        %473 = vmatpush1.msra.mxu0 1.0
        %474 = vmatprep.subr.mxu0 0.0
        %475 = vmatpush1.msra.mxu0 1.0
        %476 = vmatprep.subr.mxu0 0.0
        %477 = vmatpush1.msra.mxu0 1.0
        %478 = vmatprep.subr.mxu0 0.0
        %479 = vmatpush1.msra.mxu0 1.0
        %480 = vmatprep.subr.mxu0 0.0
        %481 = vmatpush1.msra.mxu0 1.0
        %482 = vmatprep.subr.mxu0 0.0
        %483 = vmatpush1.msra.mxu0 1.0
        %484 = vmatprep.subr.mxu0 0.0
        %485 = vmatpush1.msra.mxu0 1.0
        %486 = vmatprep.subr.mxu0 0.0
        %487 = vmatpush1.msra.mxu0 1.0
        %488 = vmatprep.subr.mxu0 0.0
        %489 = vmatpush1.msra.mxu0 1.0
        %490 = vmatprep.subr.mxu0 0.0
        %491 = vmatpush1.msra.mxu0 1.0
        %492 = vmatprep.subr.mxu0 0.0
        %493 = vmatpush1.msra.mxu0 1.0
        %494 = vmatprep.subr.mxu0 0.0
        %495 = vmatpush1.msra.mxu0 1.0
        %496 = vmatprep.subr.mxu0 0.0
        %497 = vmatpush1.msra.mxu0 1.0
        %498 = vmatprep.subr.mxu0 0.0
        %499 = vmatpush1.msra.mxu0 1.0
        %500 = vmatprep.subr.mxu0 0.0
        %501 = vmatpush1.msra.mxu0 1.0
        %502 = vmatprep.subr.mxu0 0.0
        %503 = vmatpush1.msra.mxu0 1.0
        %504 = vmatprep.subr.mxu0 0.0
        %505 = vmatpush1.msra.mxu0 1.0
        %506 = vmatprep.subr.mxu0 0.0
        %507 = vmatpush1.msra.mxu0 1.0
        %508 = vmatprep.subr.mxu0 0.0
        %509 = vmatpush1.msra.mxu0 1.0
        %510 = vmatprep.subr.mxu0 0.0
        %511 = vmatpush1.msra.mxu0 1.0
        %512 = vmatprep.subr.mxu0 0.0
        %513 = vmatpush1.msra.mxu0 1.0
        %514 = vmatprep.subr.mxu0 0.0
        %515 = vmatpush1.msra.mxu0 1.0
        %516 = vmatprep.subr.mxu0 0.0
        %517 = vmatpush1.msra.mxu0 1.0
        %518 = vmatprep.subr.mxu0 0.0
        %519 = vmatpush1.msra.mxu0 1.0
        %520 = vmatprep.subr.mxu0 0.0
        %521 = vmatpush1.msra.mxu0 1.0
        %522 = vmatprep.mubr.f32.mxu0 %v429
        %523 = vmatmul.mubr.f32.gmra.mrb[0].mxu0 %v427
        %v524 = vpop.f32.mrb[0].mxu0
        %v525 = vadd.f32 0.0, %v524
        %v526 = vpop.f32.mrb[0].mxu0
        %527 = vmatprep.mubr.f32.mxu0 %v433
        %528 = vmatmul.mubr.f32.gmra.mrb[0].mxu0 %v431
        %v529 = vpop.f32.mrb[0].mxu0
        %v530 = vadd.f32 0.0, %v529
        %v531 = vpop.f32.mrb[0].mxu0
        %532 = vmatprep.mubr.f32.mxu0 %v437
        %533 = vmatmul.mubr.f32.gmra.mrb[0].mxu0 %v435
        %v534 = vpop.f32.mrb[0].mxu0
        %v535 = vadd.f32 0.0, %v534
        %v536 = vpop.f32.mrb[0].mxu0
        %537 = vmatprep.mubr.f32.mxu0 %v441
        %538 = vmatmul.mubr.f32.gmra.mrb[0].mxu0 %v439
        %v539 = vpop.f32.mrb[0].mxu0
        %v540 = vadd.f32 0.0, %v539
        %v541 = vpop.f32.mrb[0].mxu0
        %542 = vmatprep.mubr.f32.mxu0 %v445
        %543 = vmatmul.mubr.f32.gmra.mrb[0].mxu0 %v443
        %v544 = vpop.f32.mrb[0].mxu0
        %v545 = vadd.f32 0.0, %v544
        %v546 = vpop.f32.mrb[0].mxu0
        %547 = vmatprep.mubr.f32.mxu0 %v449
        %548 = vmatmul.mubr.f32.gmra.mrb[0].mxu0 %v447
        %v549 = vpop.f32.mrb[0].mxu0
        %v550 = vadd.f32 0.0, %v549
        %v551 = vpop.f32.mrb[0].mxu0
        %552 = vmatprep.mubr.f32.mxu0 %v453
        %553 = vmatmul.mubr.f32.gmra.mrb[0].mxu0 %v451
        %v554 = vpop.f32.mrb[0].mxu0
        %v555 = vadd.f32 0.0, %v554
        %v556 = vpop.f32.mrb[0].mxu0
        %557 = vmatprep.mubr.f32.mxu0 %v457
        %558 = vmatmul.mubr.f32.gmra.mrb[0].mxu0 %v455
        %v559 = vpop.f32.mrb[0].mxu0
        %v560 = vadd.f32 0.0, %v559
        %v561 = vpop.f32.mrb[0].mxu0
        %562 = vdwg.mxu0
        %v563 = vlog2.pop %v525
        %v564 = vmul.f32 %v563, 0.6931472
        %v565 = vlog2.pop %v530
        %v566 = vmul.f32 %v565, 0.6931472
        %v567 = vlog2.pop %v535
        %v568 = vmul.f32 %v567, 0.6931472
        %v569 = vlog2.pop %v540
        %v570 = vmul.f32 %v569, 0.6931472
        %v571 = vlog2.pop %v545
        %v572 = vmul.f32 %v571, 0.6931472
        %v573 = vlog2.pop %v550
        %v574 = vmul.f32 %v573, 0.6931472
        %v575 = vlog2.pop %v555
        %v576 = vmul.f32 %v575, 0.6931472
        %v577 = vlog2.pop %v560
        %v578 = vmul.f32 %v577, 0.6931472
        %v579 = vadd.f32 %v564, %v388
        %v580 = vadd.f32 %v566, %v391
        %v581 = vadd.f32 %v568, %v394
        %v582 = vadd.f32 %v570, %v397
        %v583 = vadd.f32 %v572, %v400
        %v584 = vadd.f32 %v574, %v403
        %v585 = vadd.f32 %v576, %v406
        %v586 = vadd.f32 %v578, %v409
        %587 = vmatprep.subr.mxu0 0.0
        %588 = vmatpush1.msra.mxu0 1.0
        %589 = vmatprep.subr.mxu0 0.0
        %590 = vmatpush1.msra.mxu0 1.0
        %591 = vmatprep.subr.mxu0 0.0
        %592 = vmatpush1.msra.mxu0 1.0
        %593 = vmatprep.subr.mxu0 0.0
        %594 = vmatpush1.msra.mxu0 1.0
        %595 = vmatprep.subr.mxu0 0.0
        %596 = vmatpush1.msra.mxu0 1.0
        %597 = vmatprep.subr.mxu0 0.0
        %598 = vmatpush1.msra.mxu0 1.0
        %599 = vmatprep.subr.mxu0 0.0
        %600 = vmatpush1.msra.mxu0 1.0
        %601 = vmatprep.subr.mxu0 0.0
        %602 = vmatpush1.msra.mxu0 1.0
        %603 = vmatprep.subr.mxu0 0.0
        %604 = vmatpush1.msra.mxu0 1.0
        %605 = vmatprep.subr.mxu0 0.0
        %606 = vmatpush1.msra.mxu0 1.0
        %607 = vmatprep.subr.mxu0 0.0
        %608 = vmatpush1.msra.mxu0 1.0
        %609 = vmatprep.subr.mxu0 0.0
        %610 = vmatpush1.msra.mxu0 1.0
        %611 = vmatprep.subr.mxu0 0.0
        %612 = vmatpush1.msra.mxu0 1.0
        %613 = vmatprep.subr.mxu0 0.0
        %614 = vmatpush1.msra.mxu0 1.0
        %615 = vmatprep.subr.mxu0 0.0
        %616 = vmatpush1.msra.mxu0 1.0
        %617 = vmatprep.subr.mxu0 0.0
        %618 = vmatpush1.msra.mxu0 1.0
        %619 = vmatprep.subr.mxu0 0.0
        %620 = vmatpush1.msra.mxu0 1.0
        %621 = vmatprep.subr.mxu0 0.0
        %622 = vmatpush1.msra.mxu0 1.0
        %623 = vmatprep.subr.mxu0 0.0
        %624 = vmatpush1.msra.mxu0 1.0
        %625 = vmatprep.subr.mxu0 0.0
        %626 = vmatpush1.msra.mxu0 1.0
        %627 = vmatprep.subr.mxu0 0.0
        %628 = vmatpush1.msra.mxu0 1.0
        %629 = vmatprep.subr.mxu0 0.0
        %630 = vmatpush1.msra.mxu0 1.0
        %631 = vmatprep.subr.mxu0 0.0
        %632 = vmatpush1.msra.mxu0 1.0
        %633 = vmatprep.subr.mxu0 0.0
        %634 = vmatpush1.msra.mxu0 1.0
        %635 = vmatprep.subr.mxu0 0.0
        %636 = vmatpush1.msra.mxu0 1.0
        %637 = vmatprep.subr.mxu0 0.0
        %638 = vmatpush1.msra.mxu0 1.0
        %639 = vmatprep.subr.mxu0 0.0
        %640 = vmatpush1.msra.mxu0 1.0
        %641 = vmatprep.subr.mxu0 0.0
        %642 = vmatpush1.msra.mxu0 1.0
        %643 = vmatprep.subr.mxu0 0.0
        %644 = vmatpush1.msra.mxu0 1.0
        %645 = vmatprep.subr.mxu0 0.0
        %646 = vmatpush1.msra.mxu0 1.0
        %647 = vmatprep.subr.mxu0 0.0
        %648 = vmatpush1.msra.mxu0 1.0
        %649 = vmatprep.subr.mxu0 0.0
        %650 = vmatpush1.msra.mxu0 1.0
        %651 = vmatprep.mubr.f32.mxu0 %v371
        %652 = vmatmul.mubr.f32.gmra.mrb[0].mxu0 %v370
        %v653 = vpop.f32.mrb[0].mxu0
        %v654 = vadd.f32 0.0, %v653
        %v655 = vpop.f32.mrb[0].mxu0
        %656 = vmatprep.mubr.f32.mxu0 %v373
        %657 = vmatmul.mubr.f32.gmra.mrb[0].mxu0 %v372
        %v658 = vpop.f32.mrb[0].mxu0
        %v659 = vadd.f32 0.0, %v658
        %v660 = vpop.f32.mrb[0].mxu0
        %661 = vmatprep.mubr.f32.mxu0 %v375
        %662 = vmatmul.mubr.f32.gmra.mrb[0].mxu0 %v374
        %v663 = vpop.f32.mrb[0].mxu0
        %v664 = vadd.f32 0.0, %v663
        %v665 = vpop.f32.mrb[0].mxu0
        %666 = vmatprep.mubr.f32.mxu0 %v377
        %667 = vmatmul.mubr.f32.gmra.mrb[0].mxu0 %v376
        %v668 = vpop.f32.mrb[0].mxu0
        %v669 = vadd.f32 0.0, %v668
        %v670 = vpop.f32.mrb[0].mxu0
        %671 = vmatprep.mubr.f32.mxu0 %v379
        %672 = vmatmul.mubr.f32.gmra.mrb[0].mxu0 %v378
        %v673 = vpop.f32.mrb[0].mxu0
        %v674 = vadd.f32 0.0, %v673
        %v675 = vpop.f32.mrb[0].mxu0
        %676 = vmatprep.mubr.f32.mxu0 %v381
        %677 = vmatmul.mubr.f32.gmra.mrb[0].mxu0 %v380
        %v678 = vpop.f32.mrb[0].mxu0
        %v679 = vadd.f32 0.0, %v678
        %v680 = vpop.f32.mrb[0].mxu0
        %681 = vmatprep.mubr.f32.mxu0 %v383
        %682 = vmatmul.mubr.f32.gmra.mrb[0].mxu0 %v382
        %v683 = vpop.f32.mrb[0].mxu0
        %v684 = vadd.f32 0.0, %v683
        %v685 = vpop.f32.mrb[0].mxu0
        %686 = vmatprep.mubr.f32.mxu0 %v385
        %687 = vmatmul.mubr.f32.gmra.mrb[0].mxu0 %v384
        %v688 = vpop.f32.mrb[0].mxu0
        %v689 = vadd.f32 0.0, %v688
        %v690 = vpop.f32.mrb[0].mxu0
        %691 = vdwg.mxu0
        %v692 = vmul.f32 %v370, %v354
        %v693 = vmul.f32 %v371, %v355
        %v694 = vmul.f32 %v372, %v356
        %v695 = vmul.f32 %v373, %v357
        %v696 = vmul.f32 %v374, %v358
        %v697 = vmul.f32 %v375, %v359
        %v698 = vmul.f32 %v376, %v360
        %v699 = vmul.f32 %v377, %v361
        %v700 = vmul.f32 %v378, %v362
        %v701 = vmul.f32 %v379, %v363
        %v702 = vmul.f32 %v380, %v364
        %v703 = vmul.f32 %v381, %v365
        %v704 = vmul.f32 %v382, %v366
        %v705 = vmul.f32 %v383, %v367
        %v706 = vmul.f32 %v384, %v368
        %v707 = vmul.f32 %v385, %v369
        %708 = vmatprep.subr.mxu0 0.0
        %709 = vmatpush1.msra.mxu0 1.0
        %710 = vmatprep.subr.mxu0 0.0
        %711 = vmatpush1.msra.mxu0 1.0
        %712 = vmatprep.subr.mxu0 0.0
        %713 = vmatpush1.msra.mxu0 1.0
        %714 = vmatprep.subr.mxu0 0.0
        %715 = vmatpush1.msra.mxu0 1.0
        %716 = vmatprep.subr.mxu0 0.0
        %717 = vmatpush1.msra.mxu0 1.0
        %718 = vmatprep.subr.mxu0 0.0
        %719 = vmatpush1.msra.mxu0 1.0
        %720 = vmatprep.subr.mxu0 0.0
        %721 = vmatpush1.msra.mxu0 1.0
        %722 = vmatprep.subr.mxu0 0.0
        %723 = vmatpush1.msra.mxu0 1.0
        %724 = vmatprep.subr.mxu0 0.0
        %725 = vmatpush1.msra.mxu0 1.0
        %726 = vmatprep.subr.mxu0 0.0
        %727 = vmatpush1.msra.mxu0 1.0
        %728 = vmatprep.subr.mxu0 0.0
        %729 = vmatpush1.msra.mxu0 1.0
        %730 = vmatprep.subr.mxu0 0.0
        %731 = vmatpush1.msra.mxu0 1.0
        %732 = vmatprep.subr.mxu0 0.0
        %733 = vmatpush1.msra.mxu0 1.0
        %734 = vmatprep.subr.mxu0 0.0
        %735 = vmatpush1.msra.mxu0 1.0
        %736 = vmatprep.subr.mxu0 0.0
        %737 = vmatpush1.msra.mxu0 1.0
        %738 = vmatprep.subr.mxu0 0.0
        %739 = vmatpush1.msra.mxu0 1.0
        %740 = vmatprep.subr.mxu0 0.0
        %741 = vmatpush1.msra.mxu0 1.0
        %742 = vmatprep.subr.mxu0 0.0
        %743 = vmatpush1.msra.mxu0 1.0
        %744 = vmatprep.subr.mxu0 0.0
        %745 = vmatpush1.msra.mxu0 1.0
        %746 = vmatprep.subr.mxu0 0.0
        %747 = vmatpush1.msra.mxu0 1.0
        %748 = vmatprep.subr.mxu0 0.0
        %749 = vmatpush1.msra.mxu0 1.0
        %750 = vmatprep.subr.mxu0 0.0
        %751 = vmatpush1.msra.mxu0 1.0
        %752 = vmatprep.subr.mxu0 0.0
        %753 = vmatpush1.msra.mxu0 1.0
        %754 = vmatprep.subr.mxu0 0.0
        %755 = vmatpush1.msra.mxu0 1.0
        %756 = vmatprep.subr.mxu0 0.0
        %757 = vmatpush1.msra.mxu0 1.0
        %758 = vmatprep.subr.mxu0 0.0
        %759 = vmatpush1.msra.mxu0 1.0
        %760 = vmatprep.subr.mxu0 0.0
        %761 = vmatpush1.msra.mxu0 1.0
        %762 = vmatprep.subr.mxu0 0.0
        %763 = vmatpush1.msra.mxu0 1.0
        %764 = vmatprep.subr.mxu0 0.0
        %765 = vmatpush1.msra.mxu0 1.0
        %766 = vmatprep.subr.mxu0 0.0
        %767 = vmatpush1.msra.mxu0 1.0
        %768 = vmatprep.subr.mxu0 0.0
        %769 = vmatpush1.msra.mxu0 1.0
        %770 = vmatprep.subr.mxu0 0.0
        %771 = vmatpush1.msra.mxu0 1.0
        %772 = vmatprep.mubr.f32.mxu0 %v693
        %773 = vmatmul.mubr.f32.gmra.mrb[0].mxu0 %v692
        %v774 = vpop.f32.mrb[0].mxu0
        %v775 = vadd.f32 0.0, %v774
        %v776 = vpop.f32.mrb[0].mxu0
        %777 = vmatprep.mubr.f32.mxu0 %v695
        %778 = vmatmul.mubr.f32.gmra.mrb[0].mxu0 %v694
        %v779 = vpop.f32.mrb[0].mxu0
        %v780 = vadd.f32 0.0, %v779
        %v781 = vpop.f32.mrb[0].mxu0
        %782 = vmatprep.mubr.f32.mxu0 %v697
        %783 = vmatmul.mubr.f32.gmra.mrb[0].mxu0 %v696
        %v784 = vpop.f32.mrb[0].mxu0
        %v785 = vadd.f32 0.0, %v784
        %v786 = vpop.f32.mrb[0].mxu0
        %787 = vmatprep.mubr.f32.mxu0 %v699
        %788 = vmatmul.mubr.f32.gmra.mrb[0].mxu0 %v698
        %v789 = vpop.f32.mrb[0].mxu0
        %v790 = vadd.f32 0.0, %v789
        %v791 = vpop.f32.mrb[0].mxu0
        %792 = vmatprep.mubr.f32.mxu0 %v701
        %793 = vmatmul.mubr.f32.gmra.mrb[0].mxu0 %v700
        %v794 = vpop.f32.mrb[0].mxu0
        %v795 = vadd.f32 0.0, %v794
        %v796 = vpop.f32.mrb[0].mxu0
        %797 = vmatprep.mubr.f32.mxu0 %v703
        %798 = vmatmul.mubr.f32.gmra.mrb[0].mxu0 %v702
        %v799 = vpop.f32.mrb[0].mxu0
        %v800 = vadd.f32 0.0, %v799
        %v801 = vpop.f32.mrb[0].mxu0
        %802 = vmatprep.mubr.f32.mxu0 %v705
        %803 = vmatmul.mubr.f32.gmra.mrb[0].mxu0 %v704
        %v804 = vpop.f32.mrb[0].mxu0
        %v805 = vadd.f32 0.0, %v804
        %v806 = vpop.f32.mrb[0].mxu0
        %807 = vmatprep.mubr.f32.mxu0 %v707
        %808 = vmatmul.mubr.f32.gmra.mrb[0].mxu0 %v706
        %v809 = vpop.f32.mrb[0].mxu0
        %v810 = vadd.f32 0.0, %v809
        %v811 = vpop.f32.mrb[0].mxu0
        %812 = vdwg.mxu0
        %v813 = vld [vmem:[%s340] sm:$0x1]
        %v814 = vmul.f32 %v579, %v654
        %v815 = vmul.f32 %v580, %v659
        %v816 = vmul.f32 %v581, %v664
        %v817 = vmul.f32 %v582, %v669
        %v818 = vmul.f32 %v583, %v674
        %v819 = vmul.f32 %v584, %v679
        %v820 = vmul.f32 %v585, %v684
        %v821 = vmul.f32 %v586, %v689
        %vm822 = vcmask 7168
        %v823 = vsel %vm822, %v814, 0.0
        %v824 = vsel %vm822, %v815, 0.0
        %v825 = vadd.f32 %v823, %v824
        %v826 = vsel %vm822, %v816, 0.0
        %v827 = vadd.f32 %v825, %v826
        %v828 = vsel %vm822, %v817, 0.0
        %v829 = vadd.f32 %v827, %v828
        %v830 = vsel %vm822, %v818, 0.0
        %v831 = vadd.f32 %v829, %v830
        %v832 = vsel %vm822, %v819, 0.0
        %v833 = vadd.f32 %v831, %v832
        %v834 = vsel %vm822, %v820, 0.0
        %v835 = vadd.f32 %v833, %v834
        %v836 = vsel %vm822, %v821, 0.0
        %v837 = vadd.f32 %v835, %v836
        %838 = vadd.xlane.f32.xlu0 %v837
        %v839 = vpop.xlane.xlu0 %838
        %v840 = vrot.slane %v839, 4
        %v841 = vadd.f32 %v839, %v840
        %v842 = vrot.slane %v841, 2
        %v843 = vadd.f32 %v841, %v842
        %v844 = vrot.slane %v843, 1
        %v845 = vadd.f32 %v843, %v844
        %s846 = vtos %v845
        %v847 = vsel %vm822, %v775, 0.0
        %v848 = vsel %vm822, %v780, 0.0
        %v849 = vadd.f32 %v847, %v848
        %v850 = vsel %vm822, %v785, 0.0
        %v851 = vadd.f32 %v849, %v850
        %v852 = vsel %vm822, %v790, 0.0
        %v853 = vadd.f32 %v851, %v852
        %v854 = vsel %vm822, %v795, 0.0
        %v855 = vadd.f32 %v853, %v854
        %v856 = vsel %vm822, %v800, 0.0
        %v857 = vadd.f32 %v855, %v856
        %v858 = vsel %vm822, %v805, 0.0
        %v859 = vadd.f32 %v857, %v858
        %v860 = vsel %vm822, %v810, 0.0
        %v861 = vadd.f32 %v859, %v860
        %862 = vadd.xlane.f32.xlu0 %v861
        %v863 = vpop.xlane.xlu0 %862
        %v864 = vrot.slane %v863, 4
        %v865 = vadd.f32 %v863, %v864
        %v866 = vrot.slane %v865, 2
        %v867 = vadd.f32 %v865, %v866
        %v868 = vrot.slane %v867, 1
        %v869 = vadd.f32 %v867, %v868
        %s870 = vtos %v869
        %s871 = smul.f32 %s870, 2.0
        %s872 = ssub.f32 %s846, %s871
        %v873 = vstv %s872
        %v874 = vadd.f32 %v813, %v873
        %vm875 = vcmask 0
        %876 = vst.msk [vmem:[%s340] sm:$0x1] %vm875, %v874
        %v877 = vmax.f32 %v388, %v400
        %v878 = vmax.f32 %v391, %v403
        %v879 = vmax.f32 %v394, %v406
        %v880 = vmax.f32 %v397, %v409
        %v881 = vmax.f32 %v877, %v878
        %v882 = vmax.f32 %v879, %v880
        %v883 = vmax.f32 %v881, %v882
        %v884 = vrot.slane %v883, 4
        %v885 = vmax.f32 %v883, %v884
        %v886 = vrot.slane %v885, 2
        %v887 = vmax.f32 %v885, %v886
        %v888 = vrot.slane %v887, 1
        %v889 = vmax.f32 %v887, %v888
        %s890 = vtos %v889
        %v891 = vmax.f32 %v354, %v358
        %v892 = vmax.f32 %v356, %v360
        %v893 = vmax.f32 %v891, %v362
        %v894 = vmax.f32 %v892, %v364
        %v895 = vmax.f32 %v893, %v366
        %v896 = vmax.f32 %v894, %v368
        %v897 = vmax.f32 %v895, %v896
        %v898 = vrot.slane %v897, 4
        %v899 = vmax.f32 %v897, %v898
        %v900 = vrot.slane %v899, 2
        %v901 = vmax.f32 %v899, %v900
        %v902 = vrot.slane %v901, 1
        %v903 = vmax.f32 %v901, %v902
        %v904 = vmax.f32 %v355, %v359
        %v905 = vmax.f32 %v357, %v361
        %v906 = vmax.f32 %v904, %v363
        %v907 = vmax.f32 %v905, %v365
        %v908 = vmax.f32 %v906, %v367
        %v909 = vmax.f32 %v907, %v369
        %v910 = vmax.f32 %v908, %v909
        %v911 = vrot.slane %v910, 4
        %v912 = vmax.f32 %v910, %v911
        %v913 = vrot.slane %v912, 2
        %v914 = vmax.f32 %v912, %v913
        %v915 = vrot.slane %v914, 1
        %v916 = vmax.f32 %v914, %v915
        %v917 = vld [vmem:[%s312] sm:$0x3]
        %v920 = vcombine.low %v903, %v916
        %v922 = vunpack.c.l.s4 1966171168
        %v923 = vunpack.c.0.s8 %v922
        %v924 = vlaneseq
        %v925 = vshrl.u32 %v924, 7
        %v926 = vsub.s32 %v923, %v925
        %v927 = vrot.slane %v920, %v926
        %v929 = vunpack.c.l.s4 1966171168
        %v930 = vunpack.c.0.s8 %v929
        %v931 = vlaneseq
        %v932 = vshrl.u32 %v931, 7
        %v933 = vsub.s32 %v930, %v932
        %v934 = vrot.slane %v927, %v933
        %v936 = vmax.f32 %v917, %v934
        %v937 = vstv %s890
        %v938 = vsub.f32 %v388, %v937
        %v939 = vsub.f32 %v391, %v937
        %v940 = vsub.f32 %v394, %v937
        %v941 = vsub.f32 %v397, %v937
        %v942 = vsub.f32 %v400, %v937
        %v943 = vsub.f32 %v403, %v937
        %v944 = vsub.f32 %v406, %v937
        %v945 = vsub.f32 %v409, %v937
        %v946 = vmul.f32 %v938, 1.442695
        %v947 = vpow.pop %v946
        %v948 = vmul.f32 %v939, 1.442695
        %v949 = vpow.pop %v948
        %v950 = vmul.f32 %v940, 1.442695
        %v951 = vpow.pop %v950
        %v952 = vmul.f32 %v941, 1.442695
        %v953 = vpow.pop %v952
        %v954 = vmul.f32 %v942, 1.442695
        %v955 = vpow.pop %v954
        %v956 = vmul.f32 %v943, 1.442695
        %v957 = vpow.pop %v956
        %v958 = vmul.f32 %v944, 1.442695
        %v959 = vpow.pop %v958
        %v960 = vmul.f32 %v945, 1.442695
        %v961 = vpow.pop %v960
        %v962 = vmul.f32 %v427, %v947
        %v963 = vmul.f32 %v429, %v947
        %v964 = vmul.f32 %v431, %v949
        %v965 = vmul.f32 %v433, %v949
        %v966 = vmul.f32 %v435, %v951
        %v967 = vmul.f32 %v437, %v951
        %v968 = vmul.f32 %v439, %v953
        %v969 = vmul.f32 %v441, %v953
        %v970 = vmul.f32 %v443, %v955
        %v971 = vmul.f32 %v445, %v955
        %v972 = vmul.f32 %v447, %v957
        %v973 = vmul.f32 %v449, %v957
        %v974 = vmul.f32 %v451, %v959
        %v975 = vmul.f32 %v453, %v959
        %v976 = vmul.f32 %v455, %v961
        %v977 = vmul.f32 %v457, %v961
        %vm978 = vcmask 523264
        %v980 = vsel %vm978, 1.0, 0
        %982 = vmatprep.subr.mxu0 %v963
        %983 = vmatpush1.msra.mxu0 %v962
        %984 = vmatprep.subr.mxu0 %v965
        %985 = vmatpush1.msra.mxu0 %v964
        %986 = vmatprep.subr.mxu0 %v967
        %987 = vmatpush1.msra.mxu0 %v966
        %988 = vmatprep.subr.mxu0 %v969
        %989 = vmatpush1.msra.mxu0 %v968
        %990 = vmatprep.subr.mxu0 %v971
        %991 = vmatpush1.msra.mxu0 %v970
        %992 = vmatprep.subr.mxu0 %v973
        %993 = vmatpush1.msra.mxu0 %v972
        %994 = vmatprep.subr.mxu0 %v975
        %995 = vmatpush1.msra.mxu0 %v974
        %996 = vmatprep.subr.mxu0 %v977
        %997 = vmatpush1.msra.mxu0 %v976
        %998 = vmatprep.subr.mxu0 0.0
        %999 = vmatpush1.msra.mxu0 0.0
        %1000 = vmatprep.subr.mxu0 0.0
        %1001 = vmatpush1.msra.mxu0 0.0
        %1002 = vmatprep.subr.mxu0 0.0
        %1003 = vmatpush1.msra.mxu0 0.0
        %1004 = vmatprep.subr.mxu0 0.0
        %1005 = vmatpush1.msra.mxu0 0.0
        %1006 = vmatprep.subr.mxu0 0.0
        %1007 = vmatpush1.msra.mxu0 0.0
        %1008 = vmatprep.subr.mxu0 0.0
        %1009 = vmatpush1.msra.mxu0 0.0
        %1010 = vmatprep.subr.mxu0 0.0
        %1011 = vmatpush1.msra.mxu0 0.0
        %1012 = vmatprep.subr.mxu0 0.0
        %1013 = vmatpush1.msra.mxu0 0.0
        %1014 = vmatprep.subr.mxu0 0.0
        %1015 = vmatpush1.msra.mxu0 0.0
        %1016 = vmatprep.subr.mxu0 0.0
        %1017 = vmatpush1.msra.mxu0 0.0
        %1018 = vmatprep.subr.mxu0 0.0
        %1019 = vmatpush1.msra.mxu0 0.0
        %1020 = vmatprep.subr.mxu0 0.0
        %1021 = vmatpush1.msra.mxu0 0.0
        %1022 = vmatprep.subr.mxu0 0.0
        %1023 = vmatpush1.msra.mxu0 0.0
        %1024 = vmatprep.subr.mxu0 0.0
        %1025 = vmatpush1.msra.mxu0 0.0
        %1026 = vmatprep.subr.mxu0 0.0
        %1027 = vmatpush1.msra.mxu0 0.0
        %1028 = vmatprep.subr.mxu0 0.0
        %1029 = vmatpush1.msra.mxu0 0.0
        %1030 = vmatprep.subr.mxu0 0.0
        %1031 = vmatpush1.msra.mxu0 0.0
        %1032 = vmatprep.subr.mxu0 0.0
        %1033 = vmatpush1.msra.mxu0 0.0
        %1034 = vmatprep.subr.mxu0 0.0
        %1035 = vmatpush1.msra.mxu0 0.0
        %1036 = vmatprep.subr.mxu0 0.0
        %1037 = vmatpush1.msra.mxu0 0.0
        %1038 = vmatprep.subr.mxu0 0.0
        %1039 = vmatpush1.msra.mxu0 0.0
        %1040 = vmatprep.subr.mxu0 0.0
        %1041 = vmatpush1.msra.mxu0 0.0
        %1042 = vmatprep.subr.mxu0 0.0
        %1043 = vmatpush1.msra.mxu0 0.0
        %1044 = vmatprep.subr.mxu0 0.0
        %1045 = vmatpush1.msra.mxu0 0.0
        %1046 = vmatprep.mubr.f32.mxu0 0.0
        %1047 = vmatmul.mubr.f32.gmra.mrb[0].mxu0 %v980
        %v1048 = vpop.f32.mrb[0].mxu0
        %v1049 = vadd.f32 0.0, %v1048
        %v1050 = vpop.f32.mrb[0].mxu0
        %v1051 = vadd.f32 0.0, %v1050
        %1052 = vdwg.mxu0
        %v1053 = vsub.f32 %v937, %v936
        %v1054 = vmin.f32 %v1053, 80.0
        %v1055 = vmul.f32 %v1054, 1.442695
        %v1056 = vpow.pop %v1055
        %v1057 = vld [vmem:[%s319] sm:$0x3]
        %v1058 = vsub.f32 %v917, %v936
        %v1059 = vmul.f32 %v1058, 1.442695
        %v1060 = vpow.pop %v1059
        %v1061 = vmul.f32 %v1057, %v1060
        %v1063 = vlaneseq
        %v1064 = vshrl.u32 %v1063, 7
        %v1065 = vsub.s32 0, %v1064
        %v1066 = vrot.slane %v1056, %v1065
        %v1067 = vlaneseq
        %v1068 = vshrl.u32 %v1067, 7
        %v1069 = vsub.s32 1, %v1068
        %v1070 = vrot.slane %v1056, %v1069
        %v1073 = vmul.f32 %v1049, %v1066
        %v1074 = vmul.f32 %v1051, %v1070
        %v1077 = vcombine.low %v1073, %v1074
        %v1079 = vunpack.c.l.s4 1966171168
        %v1080 = vunpack.c.0.s8 %v1079
        %v1081 = vlaneseq
        %v1082 = vshrl.u32 %v1081, 7
        %v1083 = vsub.s32 %v1080, %v1082
        %v1084 = vrot.slane %v1077, %v1083
        %v1086 = vunpack.c.l.s4 1966171168
        %v1087 = vunpack.c.0.s8 %v1086
        %v1088 = vlaneseq
        %v1089 = vshrl.u32 %v1088, 7
        %v1090 = vsub.s32 %v1087, %v1089
        %v1091 = vrot.slane %v1084, %v1090
        %v1093 = vadd.f32 %v1061, %v1091
        %v1094 = vlaneseq
        %vm1095 = vcmp.ge.s32.totalorder %v1094, 0
        %vm1096 = vcmp.lt.s32.totalorder %v1094, 256
        %vm1097 = vmand %vm1095, %vm1096
        %1098 = vst.msk [vmem:[%s319] sm:$0x3] %vm1097, %v1093
        %1099 = vst.msk [vmem:[%s312] sm:$0x3] %vm1097, %v936
        %v1100 = vld [vmem:[%s326] sm:$0x3]
        %1101 = vmatprep.subr.mxu0 %v371
        %1102 = vmatpush1.msra.mxu0 %v370
        %1103 = vmatprep.subr.mxu0 %v373
        %1104 = vmatpush1.msra.mxu0 %v372
        %1105 = vmatprep.subr.mxu0 %v375
        %1106 = vmatpush1.msra.mxu0 %v374
        %1107 = vmatprep.subr.mxu0 %v377
        %1108 = vmatpush1.msra.mxu0 %v376
        %1109 = vmatprep.subr.mxu0 %v379
        %1110 = vmatpush1.msra.mxu0 %v378
        %1111 = vmatprep.subr.mxu0 %v381
        %1112 = vmatpush1.msra.mxu0 %v380
        %1113 = vmatprep.subr.mxu0 %v383
        %1114 = vmatpush1.msra.mxu0 %v382
        %1115 = vmatprep.subr.mxu0 %v385
        %1116 = vmatpush1.msra.mxu0 %v384
        %1117 = vmatprep.subr.mxu0 0.0
        %1118 = vmatpush1.msra.mxu0 0.0
        %1119 = vmatprep.subr.mxu0 0.0
        %1120 = vmatpush1.msra.mxu0 0.0
        %1121 = vmatprep.subr.mxu0 0.0
        %1122 = vmatpush1.msra.mxu0 0.0
        %1123 = vmatprep.subr.mxu0 0.0
        %1124 = vmatpush1.msra.mxu0 0.0
        %1125 = vmatprep.subr.mxu0 0.0
        %1126 = vmatpush1.msra.mxu0 0.0
        %1127 = vmatprep.subr.mxu0 0.0
        %1128 = vmatpush1.msra.mxu0 0.0
        %1129 = vmatprep.subr.mxu0 0.0
        %1130 = vmatpush1.msra.mxu0 0.0
        %1131 = vmatprep.subr.mxu0 0.0
        %1132 = vmatpush1.msra.mxu0 0.0
        %1133 = vmatprep.subr.mxu0 0.0
        %1134 = vmatpush1.msra.mxu0 0.0
        %1135 = vmatprep.subr.mxu0 0.0
        %1136 = vmatpush1.msra.mxu0 0.0
        %1137 = vmatprep.subr.mxu0 0.0
        %1138 = vmatpush1.msra.mxu0 0.0
        %1139 = vmatprep.subr.mxu0 0.0
        %1140 = vmatpush1.msra.mxu0 0.0
        %1141 = vmatprep.subr.mxu0 0.0
        %1142 = vmatpush1.msra.mxu0 0.0
        %1143 = vmatprep.subr.mxu0 0.0
        %1144 = vmatpush1.msra.mxu0 0.0
        %1145 = vmatprep.subr.mxu0 0.0
        %1146 = vmatpush1.msra.mxu0 0.0
        %1147 = vmatprep.subr.mxu0 0.0
        %1148 = vmatpush1.msra.mxu0 0.0
        %1149 = vmatprep.subr.mxu0 0.0
        %1150 = vmatpush1.msra.mxu0 0.0
        %1151 = vmatprep.subr.mxu0 0.0
        %1152 = vmatpush1.msra.mxu0 0.0
        %1153 = vmatprep.subr.mxu0 0.0
        %1154 = vmatpush1.msra.mxu0 0.0
        %1155 = vmatprep.subr.mxu0 0.0
        %1156 = vmatpush1.msra.mxu0 0.0
        %1157 = vmatprep.subr.mxu0 0.0
        %1158 = vmatpush1.msra.mxu0 0.0
        %1159 = vmatprep.subr.mxu0 0.0
        %1160 = vmatpush1.msra.mxu0 0.0
        %1161 = vmatprep.subr.mxu0 0.0
        %1162 = vmatpush1.msra.mxu0 0.0
        %1163 = vmatprep.subr.mxu0 0.0
        %1164 = vmatpush1.msra.mxu0 0.0
        %1165 = vmatprep.mubr.f32.mxu0 0.0
        %1166 = vmatmul.mubr.f32.gmra.mrb[0].mxu0 %v980
        %v1167 = vpop.f32.mrb[0].mxu0
        %v1168 = vadd.f32 0.0, %v1167
        %v1169 = vpop.f32.mrb[0].mxu0
        %v1170 = vadd.f32 0.0, %v1169
        %1171 = vdwg.mxu0
        %v1174 = vcombine.low %v1168, %v1170
        %v1176 = vunpack.c.l.s4 1966171168
        %v1177 = vunpack.c.0.s8 %v1176
        %v1178 = vlaneseq
        %v1179 = vshrl.u32 %v1178, 7
        %v1180 = vsub.s32 %v1177, %v1179
        %v1181 = vrot.slane %v1174, %v1180
        %v1183 = vunpack.c.l.s4 1966171168
        %v1184 = vunpack.c.0.s8 %v1183
        %v1185 = vlaneseq
        %v1186 = vshrl.u32 %v1185, 7
        %v1187 = vsub.s32 %v1184, %v1186
        %v1188 = vrot.slane %v1181, %v1187
        %v1190 = vadd.f32 %v1100, %v1188
        %1191 = vst.msk [vmem:[%s326] sm:$0x3] %vm1097, %v1190
        %s1192 = sand.u32 %s109, 1
        %s1193 = scalar_lea.sflag [#allocation4], %s1192
        %s1194 = sand.u32 %s109, 1
        %s1195 = smul.addr %s1194, 2
        %s1196 = scalar_lea.vmem [#allocation7], %s1195
        %s1197 = sand.u32 %s29, 1
        %s1198 = scalar_lea.sflag [#allocation9], %s1197
        %s1199 = sand.u32 %s135, 1
        %s1200 = smul.addr %s1199, 2
        %s1201 = scalar_lea.vmem [#allocation8], %s1200
        %s1202 = sand.u32 %s29, 1
        %s1203 = scalar_lea.sflag [#allocation9], %s1202
        %s1204 = sand.u32 %s161, 1
        %s1205 = smul.addr %s1204, 2
        %s1206 = scalar_lea.vmem [#allocation10], %s1205
        %p1207 = scmp.lt.s32.totalorder %s33, 1
        %s1208 = scalar_select %p1207, %s33, 1
        %s1209 = scalar_lea.vmem %s5, %s1208
        // Predicated region
        $region41: #{tpu_custom_call.1} parent=27 // pred_check
          %p1210 = pneg %p119
        $region42: #{tpu_custom_call.1} parent=27 // pred_check_branch
          %1212 = sbr.rel (%p1210) target = $region44
        $region43: #{tpu_custom_call.1} parent=27 // pred_region
          %s1214 = ssub.s32 32, 32
          %1215 = vsyncadd %s1193, %s1214
          %s1216 = smul.addr %s33, 2
          %s1217 = smul.addr %s1216, 16
          %s1218 = scalar_lea.hbm %s2, %s1217
          %s1220 = sshll.u32 %s1196, 4
          %s1221 = int_to_ptr.vmem [resolvable:$true] %s1220
          %1223 = dma.vmem_to_hbm [thread:$0]  %s1221, 32, %s1218, %s1193
        $region44: #{tpu_custom_call.1} parent=27 // pred_fallthru
          _
        // Predicated region
        $region45: #{tpu_custom_call.1} parent=27 // pred_check
          %p1224 = pneg %p145
        $region46: #{tpu_custom_call.1} parent=27 // pred_check_branch
          %1226 = sbr.rel (%p1224) target = $region48
        $region47: #{tpu_custom_call.1} parent=27 // pred_region
          %s1228 = ssub.s32 32, 32
          %1229 = vsyncadd %s1198, %s1228
          %s1230 = smul.addr %s33, 2
          %s1231 = smul.addr %s1230, 16
          %s1232 = scalar_lea.hbm %s3, %s1231
          %s1234 = sshll.u32 %s1201, 4
          %s1235 = int_to_ptr.vmem [resolvable:$true] %s1234
          %1237 = dma.vmem_to_hbm [thread:$0]  %s1235, 32, %s1232, %s1198
        $region48: #{tpu_custom_call.1} parent=27 // pred_fallthru
          _
        // Predicated region
        $region49: #{tpu_custom_call.1} parent=27 // pred_check
          %p1238 = pneg %p171
        $region50: #{tpu_custom_call.1} parent=27 // pred_check_branch
          %1240 = sbr.rel (%p1238) target = $region52
        $region51: #{tpu_custom_call.1} parent=27 // pred_region
          %s1242 = ssub.s32 32, 32
          %1243 = vsyncadd %s1203, %s1242
          %s1244 = smul.addr %s33, 2
          %s1245 = smul.addr %s1244, 16
          %s1246 = scalar_lea.hbm %s4, %s1245
          %s1248 = sshll.u32 %s1206, 4
          %s1249 = int_to_ptr.vmem [resolvable:$true] %s1248
          %1251 = dma.vmem_to_hbm [thread:$0]  %s1249, 32, %s1246, %s1203
        $region52: #{tpu_custom_call.1} parent=27 // pred_fallthru
          _
        // Predicated region
        $region53: #{tpu_custom_call.1} parent=27 // pred_check
          %p1252 = pneg %p197
        $region54: #{tpu_custom_call.1} parent=27 // pred_check_branch
          %1254 = sbr.rel (%p1252) target = $region56
        $region55: #{tpu_custom_call.1} parent=27 // pred_region
          _
        $region56: #{tpu_custom_call.1} parent=27 // pred_fallthru
          _
      $region28: #{tpu_custom_call.1} parent=5 // pred_fallthru
        _
      %p1255 = scmp.le.s32.totalorder 2, %s24
      // Predicated region
      $region57: #{tpu_custom_call.1} parent=5 // pred_check
        %p1256 = pneg %p1255
      $region58: #{tpu_custom_call.1} parent=5 // pred_check_branch
        %1258 = sbr.rel (%p1256) target = $region60
      $region59: #{tpu_custom_call.1} parent=5 // pred_region
        %s1259 = ssub.s32 %s24, 2
        // Predicated region
        $region61: #{tpu_custom_call.1} parent=59 // pred_check
          %p1260 = pneg %p125
        $region62: #{tpu_custom_call.1} parent=59 // pred_check_branch
          %1262 = sbr.rel (%p1260) target = $region64
        $region63: #{tpu_custom_call.1} parent=59 // pred_region
          %s1263 = sand.u32 %s110, 1
          %s1264 = scalar_lea.sflag [#allocation4], %s1263
          %s1265 = sand.u32 %s110, 1
          %s1266 = smul.addr %s1265, 2
          %s1267 = scalar_lea.vmem [#allocation7], %s1266
          %1268 = dma.done %s1264, 32
        $region64: #{tpu_custom_call.1} parent=59 // pred_fallthru
          _
        // Predicated region
        $region65: #{tpu_custom_call.1} parent=59 // pred_check
          %p1269 = pneg %p151
        $region66: #{tpu_custom_call.1} parent=59 // pred_check_branch
          %1271 = sbr.rel (%p1269) target = $region68
        $region67: #{tpu_custom_call.1} parent=59 // pred_region
          %s1272 = sand.u32 %s30, 1
          %s1273 = scalar_lea.sflag [#allocation9], %s1272
          %s1274 = sand.u32 %s136, 1
          %s1275 = smul.addr %s1274, 2
          %s1276 = scalar_lea.vmem [#allocation8], %s1275
          %1277 = dma.done %s1273, 32
        $region68: #{tpu_custom_call.1} parent=59 // pred_fallthru
          _
        // Predicated region
        $region69: #{tpu_custom_call.1} parent=59 // pred_check
          %p1278 = pneg %p177
        $region70: #{tpu_custom_call.1} parent=59 // pred_check_branch
          %1280 = sbr.rel (%p1278) target = $region72
        $region71: #{tpu_custom_call.1} parent=59 // pred_region
          %s1281 = sand.u32 %s30, 1
          %s1282 = scalar_lea.sflag [#allocation9], %s1281
          %s1283 = sand.u32 %s162, 1
          %s1284 = smul.addr %s1283, 2
          %s1285 = scalar_lea.vmem [#allocation10], %s1284
          %1286 = dma.done %s1282, 32
        $region72: #{tpu_custom_call.1} parent=59 // pred_fallthru
          _
        // Predicated region
        $region73: #{tpu_custom_call.1} parent=59 // pred_check
          %p1287 = pneg %p203
        $region74: #{tpu_custom_call.1} parent=59 // pred_check_branch
          %1289 = sbr.rel (%p1287) target = $region76
        $region75: #{tpu_custom_call.1} parent=59 // pred_region
          %p1290 = scmp.lt.s32.totalorder %s35, 1
          %s1291 = scalar_select %p1290, %s35, 1
          %s1292 = scalar_lea.vmem %s5, %s1291
        $region76: #{tpu_custom_call.1} parent=59 // pred_fallthru
          _
      $region60: #{tpu_custom_call.1} parent=5 // pred_fallthru
        _
    $region6: #{tpu_custom_call.1} parent=1 // loop_footer
      %s28 = sadd.s32 1, %s24
    $region7: #{tpu_custom_call.1} parent=1 // loop_footer_branch
      %23 = sbr.rel target = $region3
    $region8: #{tpu_custom_call.1} parent=1 // loop_exit
      _
    %1293 = vsyncpa [#allocation3], 1
    %s1294 = scalar_lea.sflag [#allocation3], 1
    %1295 = vsyncpa %s1294, 1
    %1296 = vsyncpa [#allocation6], 1
    %s1297 = scalar_lea.sflag [#allocation6], 1
    %1298 = vsyncpa %s1297, 1
    %1299 = vsyncpa [#allocation4], 1
    %s1300 = scalar_lea.sflag [#allocation4], 1
    %1301 = vsyncpa %s1300, 1
    %1302 = vsyncpa [#allocation9], 1
    %s1303 = scalar_lea.sflag [#allocation9], 1
    %1304 = vsyncpa %s1303, 1

</llo_original>
